<compile_context>
chip_gen: v5e
topology: v5e:2x2
jax: 0.10.0
libtpu: 0.0.40
codegen_flags: <defaults>
</compile_context>

<pallas_src>
import functools

import jax
import jax.numpy as jnp
from jax.experimental import pallas as pl
from jax.experimental.pallas import tpu as pltpu

LANE = 128
LANE_PAD_THRESHOLD = 64          # only lane-pad channel axes when C >= this
VMEM_ACT_BUDGET = 40 << 20       # activation double-buffer budget (v7x-safe)
VMEM_LIMIT_BYTES = 48 << 20      # scoped VMEM limit (safe on v5e/v6e/v7x)


def _silu(x):
    return x * jax.nn.sigmoid(x)


def _round_up(x, m):
    return (x + m - 1) // m * m


def _pad_axis(a, axis, new_size):
    if new_size == a.shape[axis]:
        return a
    pad = [(0, 0)] * a.ndim
    pad[axis] = (0, new_size - a.shape[axis])
    return jnp.pad(a, pad)


def _pad2(a, rows, cols):
    return _pad_axis(_pad_axis(a, 0, rows), 1, cols)


def _maybe_lane_pad(c):
    return _round_up(c, LANE) if c >= LANE_PAD_THRESHOLD else c


def _choose_row_tile(M, bytes_per_row, row_tile):
    """Pick the row-tile size.

    Targets: >=2 tiles so ("parallel",) can shard across v7x's 2 TensorCores,
    256-multiple tiles (v6e MXU / bf16 sublane packing), and a double-buffered
    activation footprint that fits the VMEM budget (v7x has only 64 MiB).
    """
    if M <= 256:                       # tiny inputs: single tile, minimal padding
        return _round_up(M, 16)
    tm = max(256, min(row_tile, _round_up(pl.cdiv(M, 2), 256)))
    while tm > 256 and 2 * tm * bytes_per_row > VMEM_ACT_BUDGET:
        tm //= 2
    return tm


# ----------------------------------------------------------------------------
# Fused Pallas kernel: out = silu( silu(x1@W1 + b1) @ W2a + x2 @ W2b + b2 )
# ----------------------------------------------------------------------------
def _distribute_kernel(x1_ref, x2_ref, w1_ref, b1_ref, w2a_ref, w2b_ref, b2_ref,
                       o_ref):
    # cv1 (1x1 conv, BN scale folded into W1) + SiLU, on the row tile.
    y1 = jnp.dot(x1_ref[...], w1_ref[...], preferred_element_type=jnp.float32)
    y1 = _silu(y1 + b1_ref[...]).astype(jnp.bfloat16)
    # cv2 on [cv1(x1) ; x2]: the channel concat is a split-K sum of two matmuls.
    acc = jnp.dot(y1, w2a_ref[...], preferred_element_type=jnp.float32)
    acc = acc + jnp.dot(x2_ref[...], w2b_ref[...],
                        preferred_element_type=jnp.float32)
    o_ref[...] = _silu(acc + b2_ref[...]).astype(o_ref.dtype)  # bf16 writeback


# ----------------------------------------------------------------------------
# One-time parameter packing: fold BN, split cv2 weight, cast bf16, maybe pad.
# ----------------------------------------------------------------------------
def fold_bn_and_pack_params(params):
    """Do the weight-side work ONCE at model init (not per forward call)."""
    w1, s1, b1 = params["cv1"]          # w1: (C1, Cmid)
    w2, s2, b2 = params["cv2"]          # w2: (Cmid + C2, Cout)
    C1, Cmid = w1.shape
    Ck, Cout = w2.shape
    C2 = Ck - Cmid

    C1p, C2p = _maybe_lane_pad(C1), _maybe_lane_pad(C2)
    Cmp, Cop = _maybe_lane_pad(Cmid), _maybe_lane_pad(Cout)

    w1f = w1 * s1[None, :]              # BN scale folded into the conv weight
    w2f = w2 * s2[None, :]
    w2a, w2b = w2f[:Cmid], w2f[Cmid:]   # split at the concat boundary

    bf = jnp.bfloat16
    return {
        "w1": _pad2(w1f, C1p, Cmp).astype(bf),
        "w2a": _pad2(w2a, Cmp, Cop).astype(bf),
        "w2b": _pad2(w2b, C2p, Cop).astype(bf),
        "b1": _pad_axis(b1[None, :], 1, Cmp).astype(jnp.float32),
        "b2": _pad_axis(b2[None, :], 1, Cop).astype(jnp.float32),
    }


# ----------------------------------------------------------------------------
# NHWC fast path (intended model-internal entry point: no transposes at all)
# ----------------------------------------------------------------------------
@functools.partial(jax.jit, static_argnames=("out_channels", "row_tile"))
def distribute_forward_nhwc(x1_nhwc, x2_nhwc, packed, *, out_channels,
                            row_tile=2048):
    N, H, W, C1 = x1_nhwc.shape
    C2 = x2_nhwc.shape[-1]
    w1, w2a, w2b = packed["w1"], packed["w2a"], packed["w2b"]
    b1, b2 = packed["b1"], packed["b2"]
    C1p, Cmp = w1.shape
    C2p, Cop = w2b.shape
    Cout = out_channels

    M = N * H * W
    bytes_per_row = (C1p + C2p + Cop) * 2          # bf16 in + bf16 out
    tm = _choose_row_tile(M, bytes_per_row, row_tile)
    Mp = _round_up(M, tm)

    bf = jnp.bfloat16
    # For small channel counts these pads are no-ops (no 128-lane blowup); the
    # bf16 cast is a no-op too when the model keeps bf16 activations end-to-end.
    x1r = _pad_axis(_pad_axis(x1_nhwc.reshape(M, C1), 1, C1p), 0, Mp).astype(bf)
    x2r = _pad_axis(_pad_axis(x2_nhwc.reshape(M, C2), 1, C2p), 0, Mp).astype(bf)

    cost = pl.CostEstimate(
        flops=2 * Mp * (C1p * Cmp + (Cmp + C2p) * Cop),
        transcendentals=Mp * (Cmp + Cop),
        bytes_accessed=2 * (Mp * (C1p + C2p + Cop)
                            + C1p * Cmp + (Cmp + C2p) * Cop)
                       + 4 * (Cmp + Cop),
    )

    out = pl.pallas_call(
        _distribute_kernel,
        out_shape=jax.ShapeDtypeStruct((Mp, Cop), jnp.bfloat16),
        grid=(Mp // tm,),
        in_specs=[
            pl.BlockSpec((tm, C1p), lambda i: (i, 0)),    # x1 row tile
            pl.BlockSpec((tm, C2p), lambda i: (i, 0)),    # x2 row tile
            pl.BlockSpec((C1p, Cmp), lambda i: (0, 0)),   # W1 (BN-folded), resident
            pl.BlockSpec((1, Cmp), lambda i: (0, 0)),     # b1
            pl.BlockSpec((Cmp, Cop), lambda i: (0, 0)),   # W2 top (vs cv1 out)
            pl.BlockSpec((C2p, Cop), lambda i: (0, 0)),   # W2 bottom (vs x2)
            pl.BlockSpec((1, Cop), lambda i: (0, 0)),     # b2
        ],
        out_specs=pl.BlockSpec((tm, Cop), lambda i: (i, 0)),
        compiler_params=pltpu.CompilerParams(
            dimension_semantics=("parallel",),            # shard row tiles (v7x)
            vmem_limit_bytes=VMEM_LIMIT_BYTES,
        ),
        cost_estimate=cost,
    )(x1r, x2r, w1, b1, w2a, w2b, b2)

    return out[:M, :Cout].reshape(N, H, W, Cout)


# ----------------------------------------------------------------------------
# NCHW wrapper (module-compatible I/O; layout plumbing only)
# ----------------------------------------------------------------------------
@functools.partial(jax.jit, static_argnames=("out_channels", "row_tile"))
def distribute_forward_nchw(x1_nchw, x2_nchw, packed, *, out_channels,
                            row_tile=2048):
    # In a full model keep activations NHWC bf16 end-to-end and call
    # distribute_forward_nhwc directly so these transposes cancel across layers.
    x1 = jnp.transpose(x1_nchw, (0, 2, 3, 1))
    x2 = jnp.transpose(x2_nchw, (0, 2, 3, 1))
    out = distribute_forward_nhwc(x1, x2, packed, out_channels=out_channels,
                                  row_tile=row_tile)
    return jnp.transpose(out, (0, 3, 1, 2))


# ----------------------------------------------------------------------------
# Parameter construction (deterministic, synthetic) — 1x1 Conv + BN(eval) stats
# ----------------------------------------------------------------------------
def _make_conv1x1_params(key, cin, cout):
    k1, k2, k3, k4, k5 = jax.random.split(key, 5)
    w = jax.random.normal(k1, (cin, cout), jnp.float32) / jnp.sqrt(cin)
    gamma = 1.0 + 0.1 * jax.random.normal(k2, (cout,), jnp.float32)
    beta = 0.1 * jax.random.normal(k3, (cout,), jnp.float32)
    rmean = 0.1 * jax.random.normal(k4, (cout,), jnp.float32)
    rvar = jnp.abs(jax.random.normal(k5, (cout,), jnp.float32)) + 0.5
    eps = 1e-5
    scale = gamma / jnp.sqrt(rvar + eps)
    bias = beta - rmean * scale
    return w, scale, bias


def init_distribute_params(key, c_in1, c_in2, out_channels):
    k1, k2 = jax.random.split(key)
    return {
        "cv1": _make_conv1x1_params(k1, c_in1, out_channels),
        "cv2": _make_conv1x1_params(k2, out_channels + c_in2, out_channels),
    }


# ----------------------------------------------------------------------------
# Pure-JAX reference (module semantics, optionally matching kernel numerics)
# ----------------------------------------------------------------------------
def distribute_layer_reference(x1_nchw, x2_nchw, params, match_kernel_dtype):
    w1, s1, b1 = params["cv1"]
    w2, s2, b2 = params["cv2"]
    N, C1, H, W = x1_nchw.shape
    C2 = x2_nchw.shape[1]
    Cout = w2.shape[1]
    M = N * H * W

    w1f = w1 * s1[None, :]
    w2f = w2 * s2[None, :]
    cast = (lambda a: a.astype(jnp.bfloat16)) if match_kernel_dtype else (lambda a: a)

    x1 = jnp.transpose(x1_nchw, (0, 2, 3, 1)).reshape(M, C1)
    x2 = jnp.transpose(x2_nchw, (0, 2, 3, 1)).reshape(M, C2)

    y1 = jnp.dot(cast(x1), cast(w1f), preferred_element_type=jnp.float32)
    y1 = _silu(y1 + b1[None, :])
    cat = jnp.concatenate([cast(y1), cast(x2)], axis=-1)
    y2 = jnp.dot(cat, cast(w2f), preferred_element_type=jnp.float32)
    out = _silu(y2 + b2[None, :]).reshape(N, H, W, Cout)
    return jnp.transpose(out, (0, 3, 1, 2))


if __name__ == "__main__":
    key = jax.random.PRNGKey(0)
    k1, k2, kp = jax.random.split(key, 3)

    N, H, W = 2, 16, 16
    C_IN1, C_IN2, C_OUT = 4, 6, 8

    x1 = jax.random.normal(k1, (N, C_IN1, H, W), jnp.float32)
    x2 = jax.random.normal(k2, (N, C_IN2, H, W), jnp.float32)
    params = init_distribute_params(kp, C_IN1, C_IN2, C_OUT)

    # Weight-side work (BN fold, cv2 split, bf16 cast, optional padding) once.
    packed = fold_bn_and_pack_params(params)

    out = distribute_forward_nchw(x1, x2, packed, out_channels=C_OUT)
    out = jax.block_until_ready(out)
    assert out.shape == (N, C_OUT, H, W), out.shape

    out_f32 = out.astype(jnp.float32)

    # Reference mirroring the kernel's numerics (bf16 in, fp32 accum, bf16 out).
    ref_bf16 = distribute_layer_reference(x1, x2, params, match_kernel_dtype=True)
    err = float(jnp.max(jnp.abs(out_f32 - ref_bf16)))
    assert jnp.allclose(out_f32, ref_bf16, atol=3e-2, rtol=3e-2), err

    # Full fp32 reference (module semantics) with bf16-level tolerance.
    ref_fp32 = distribute_layer_reference(x1, x2, params, match_kernel_dtype=False)
    err32 = float(jnp.max(jnp.abs(out_f32 - ref_fp32)))
    assert jnp.allclose(out_f32, ref_fp32, atol=8e-2, rtol=8e-2), err32

    print("KERNEL_OK")
</pallas_src>

<mosaic_0001>
module attributes {stable_mosaic.version = 11 : i64} {
  func.func @_distribute_kernel(%arg0: i32, %arg1: memref<256x4xbf16, #tpu.memory_space<vmem>>, %arg2: memref<256x6xbf16, #tpu.memory_space<vmem>>, %arg3: memref<4x8xbf16, #tpu.memory_space<vmem>>, %arg4: memref<1x8xf32, #tpu.memory_space<vmem>>, %arg5: memref<8x8xbf16, #tpu.memory_space<vmem>>, %arg6: memref<6x8xbf16, #tpu.memory_space<vmem>>, %arg7: memref<1x8xf32, #tpu.memory_space<vmem>>, %arg8: memref<256x8xbf16, #tpu.memory_space<vmem>>) attributes {dimension_semantics = [#tpu.dimension_semantics<parallel>], iteration_bounds = array<i64: 2>, scalar_prefetch = 0 : i64, scratch_operands = 0 : i64, tpu.core_type = #tpu.core_type<tc>, window_params = [{transform_indices = @transform_0, window_bounds = array<i64: 256, 4>}, {transform_indices = @transform_1, window_bounds = array<i64: 256, 6>}, {pipeline_mode = #tpu.pipeline_mode<synchronous>, transform_indices = @transform_2, window_bounds = array<i64: 4, 8>}, {pipeline_mode = #tpu.pipeline_mode<synchronous>, transform_indices = @transform_3, window_bounds = array<i64: 1, 8>}, {pipeline_mode = #tpu.pipeline_mode<synchronous>, transform_indices = @transform_4, window_bounds = array<i64: 8, 8>}, {pipeline_mode = #tpu.pipeline_mode<synchronous>, transform_indices = @transform_5, window_bounds = array<i64: 6, 8>}, {pipeline_mode = #tpu.pipeline_mode<synchronous>, transform_indices = @transform_6, window_bounds = array<i64: 1, 8>}, {transform_indices = @transform_7, window_bounds = array<i64: 256, 8>}]} {
    %c0 = arith.constant 0 : index
    %c0_0 = arith.constant 0 : index
    %0 = vector.load %arg1[%c0, %c0_0] : memref<256x4xbf16, #tpu.memory_space<vmem>>, vector<256x4xbf16>
    %c0_1 = arith.constant 0 : index
    %c0_2 = arith.constant 0 : index
    %1 = vector.load %arg3[%c0_1, %c0_2] : memref<4x8xbf16, #tpu.memory_space<vmem>>, vector<4x8xbf16>
    %cst = arith.constant dense<0.000000e+00> : vector<256x8xf32>
    %2 = tpu.matmul %0, %1, %cst {dimension_numbers = #tpu.dot_dimension_numbers<[1], [0], [0], [1], [0, 0, 1, 1], [], []>} : vector<256x4xbf16>, vector<4x8xbf16>, vector<256x8xf32> -> vector<256x8xf32>
    %c0_3 = arith.constant 0 : index
    %c0_4 = arith.constant 0 : index
    %3 = vector.load %arg4[%c0_3, %c0_4] : memref<1x8xf32, #tpu.memory_space<vmem>>, vector<1x8xf32>
    %4 = vector.broadcast %3 : vector<1x8xf32> to vector<256x8xf32>
    %5 = arith.addf %2, %4 : vector<256x8xf32>
    %6 = arith.negf %5 : vector<256x8xf32>
    %7 = math.exp %6 : vector<256x8xf32>
    %cst_5 = arith.constant 1.000000e+00 : f32
    %8 = vector.broadcast %cst_5 : f32 to vector<256x8xf32>
    %9 = arith.addf %8, %7 : vector<256x8xf32>
    %10 = arith.divf %8, %9 : vector<256x8xf32>
    %11 = arith.mulf %5, %10 : vector<256x8xf32>
    %12 = arith.truncf %11 : vector<256x8xf32> to vector<256x8xbf16>
    %c0_6 = arith.constant 0 : index
    %c0_7 = arith.constant 0 : index
    %13 = vector.load %arg5[%c0_6, %c0_7] : memref<8x8xbf16, #tpu.memory_space<vmem>>, vector<8x8xbf16>
    %cst_8 = arith.constant dense<0.000000e+00> : vector<256x8xf32>
    %14 = tpu.matmul %12, %13, %cst_8 {dimension_numbers = #tpu.dot_dimension_numbers<[1], [0], [0], [1], [0, 0, 1, 1], [], []>} : vector<256x8xbf16>, vector<8x8xbf16>, vector<256x8xf32> -> vector<256x8xf32>
    %c0_9 = arith.constant 0 : index
    %c0_10 = arith.constant 0 : index
    %15 = vector.load %arg2[%c0_9, %c0_10] : memref<256x6xbf16, #tpu.memory_space<vmem>>, vector<256x6xbf16>
    %c0_11 = arith.constant 0 : index
    %c0_12 = arith.constant 0 : index
    %16 = vector.load %arg6[%c0_11, %c0_12] : memref<6x8xbf16, #tpu.memory_space<vmem>>, vector<6x8xbf16>
    %cst_13 = arith.constant dense<0.000000e+00> : vector<256x8xf32>
    %17 = tpu.matmul %15, %16, %cst_13 {dimension_numbers = #tpu.dot_dimension_numbers<[1], [0], [0], [1], [0, 0, 1, 1], [], []>} : vector<256x6xbf16>, vector<6x8xbf16>, vector<256x8xf32> -> vector<256x8xf32>
    %18 = arith.addf %14, %17 : vector<256x8xf32>
    %c0_14 = arith.constant 0 : index
    %c0_15 = arith.constant 0 : index
    %19 = vector.load %arg7[%c0_14, %c0_15] : memref<1x8xf32, #tpu.memory_space<vmem>>, vector<1x8xf32>
    %20 = vector.broadcast %19 : vector<1x8xf32> to vector<256x8xf32>
    %21 = arith.addf %18, %20 : vector<256x8xf32>
    %22 = arith.negf %21 : vector<256x8xf32>
    %23 = math.exp %22 : vector<256x8xf32>
    %cst_16 = arith.constant 1.000000e+00 : f32
    %24 = vector.broadcast %cst_16 : f32 to vector<256x8xf32>
    %25 = arith.addf %24, %23 : vector<256x8xf32>
    %26 = arith.divf %24, %25 : vector<256x8xf32>
    %27 = arith.mulf %21, %26 : vector<256x8xf32>
    %28 = arith.truncf %27 : vector<256x8xf32> to vector<256x8xbf16>
    %c0_17 = arith.constant 0 : index
    %c0_18 = arith.constant 0 : index
    %29 = vector.load %arg8[%c0_17, %c0_18] : memref<256x8xbf16, #tpu.memory_space<vmem>>, vector<256x8xbf16>
    tpu.vector_store %arg8[%c0_17, %c0_18], %28 {strides = array<i32>} : memref<256x8xbf16, #tpu.memory_space<vmem>>, vector<256x8xbf16>,
    return
  }
  func.func @transform_0(%arg0: i32) -> (i32, i32) {
    %c0_i32 = arith.constant 0 : i32
    %c0_i32_0 = arith.constant 0 : i32
    return %arg0, %c0_i32 : i32, i32
  }
  func.func @transform_1(%arg0: i32) -> (i32, i32) {
    %c0_i32 = arith.constant 0 : i32
    %c0_i32_0 = arith.constant 0 : i32
    return %arg0, %c0_i32 : i32, i32
  }
  func.func @transform_2(%arg0: i32) -> (i32, i32) {
    %c0_i32 = arith.constant 0 : i32
    %c0_i32_0 = arith.constant 0 : i32
    %c0_i32_1 = arith.constant 0 : i32
    return %c0_i32, %c0_i32_0 : i32, i32
  }
  func.func @transform_3(%arg0: i32) -> (i32, i32) {
    %c0_i32 = arith.constant 0 : i32
    %c0_i32_0 = arith.constant 0 : i32
    %c0_i32_1 = arith.constant 0 : i32
    return %c0_i32, %c0_i32_0 : i32, i32
  }
  func.func @transform_4(%arg0: i32) -> (i32, i32) {
    %c0_i32 = arith.constant 0 : i32
    %c0_i32_0 = arith.constant 0 : i32
    %c0_i32_1 = arith.constant 0 : i32
    return %c0_i32, %c0_i32_0 : i32, i32
  }
  func.func @transform_5(%arg0: i32) -> (i32, i32) {
    %c0_i32 = arith.constant 0 : i32
    %c0_i32_0 = arith.constant 0 : i32
    %c0_i32_1 = arith.constant 0 : i32
    return %c0_i32, %c0_i32_0 : i32, i32
  }
  func.func @transform_6(%arg0: i32) -> (i32, i32) {
    %c0_i32 = arith.constant 0 : i32
    %c0_i32_0 = arith.constant 0 : i32
    %c0_i32_1 = arith.constant 0 : i32
    return %c0_i32, %c0_i32_0 : i32, i32
  }
  func.func @transform_7(%arg0: i32) -> (i32, i32) {
    %c0_i32 = arith.constant 0 : i32
    %c0_i32_0 = arith.constant 0 : i32
    return %arg0, %c0_i32 : i32, i32
  }
}

</mosaic_0001>

<llo_original>
// kernel: distribute_forward_nhwc.1
$region0: #{distribute_forward_nhwc.1}
  #allocation0 [shape = 'u32[]', space=smem, size = 0x4, offset = 0x4, fixed_abs, tag = 'smem constant byte address 0x4 - core index']
  #allocation1 [shape = 'u32[72,128]{1,0:T(1,128)}', space=vmem, size = 0x9000, scoped, tag = 'internal scratch']
  %s0 = inlined_call_operand.vmem [shape: bf16[512,4], index: 0, kind: input, shape index: {}]
  %s1 = inlined_call_operand.vmem [shape: bf16[512,6], index: 1, kind: input, shape index: {}]
  %s2 = inlined_call_operand.vmem [shape: bf16[4,8], index: 2, kind: input, shape index: {}]
  %s3 = inlined_call_operand.vmem [shape: f32[1,8], index: 3, kind: input, shape index: {}]
  %s4 = inlined_call_operand.vmem [shape: bf16[8,8], index: 4, kind: input, shape index: {}]
  %s5 = inlined_call_operand.vmem [shape: bf16[6,8], index: 5, kind: input, shape index: {}]
  %s6 = inlined_call_operand.vmem [shape: f32[1,8], index: 6, kind: input, shape index: {}]
  %s7 = inlined_call_operand.vmem [shape: bf16[512,8], index: 7, kind: output, shape index: {}]
  %s8 = sld [smem:[#allocation0]]
  $region61: #{distribute_forward_nhwc.1} parent=0
    _
  %s10 = ssub.s32 1, %s8
  %s11 = scalar_select 0, %s10, %s8
  loop: start=0, step=1, limit=4
  $region2: #{distribute_forward_nhwc.1} parent=0 // loop_pre_header
    _
  $region3: #{distribute_forward_nhwc.1} parent=0 // loop_header
    %s13 = sphi 0, %s17
    %p14 = scmp.ge.s32.totalorder %s13, 4
    %s23 = sphi 0, %s25
    %s26 = sphi 0, %s23
    %s27 = sphi 0, %s26
    %s43 = sphi 0, %s27
    %s49 = sphi 0, %s51
    %s52 = sphi 0, %s49
    %s53 = sphi 0, %s52
    %s69 = sphi 0, %s53
    %s73 = sphi 0, %s73
    %s75 = sphi 0, %s73
    %s76 = sphi 0, %s75
    %s90 = sphi 0, %s76
    %s94 = sphi 0, %s94
    %s96 = sphi 0, %s94
    %s97 = sphi 0, %s96
    %s111 = sphi 0, %s97
    %s115 = sphi 0, %s115
    %s117 = sphi 0, %s115
    %s118 = sphi 0, %s117
    %s132 = sphi 0, %s118
    %s136 = sphi 0, %s136
    %s138 = sphi 0, %s136
    %s139 = sphi 0, %s138
    %s153 = sphi 0, %s139
    %s157 = sphi 0, %s157
    %s159 = sphi 0, %s157
    %s160 = sphi 0, %s159
    %s174 = sphi 0, %s160
    %s180 = sphi 0, %s182
    %s183 = sphi 0, %s180
    %s184 = sphi 0, %s183
    %s200 = sphi 0, %s184
  $region4: #{distribute_forward_nhwc.1} parent=0 // loop_header_branch
    %16 = sbr.rel (%p14) target = $region8
  $region5: #{distribute_forward_nhwc.1} parent=0 // loop_body
    %s18 = ssub.s32 %s13, 1
    %s19 = ssub.s32 %s13, 2
    %s20 = sadd.s32 %s13, 1
    %s21 = ssub.s32 %s13, %s20
    %p22 = scmp.eq.s32.totalorder %s21, 0
    %s24 = sadd.s32 %s23, 1
    %s25 = scalar_select %p22, %s23, %s24
    %p28 = pneg %p22
    %p29 = scmp.eq.s32.totalorder %s13, 1
    %p30 = por %p28, %p29
    %p31 = scmp.ne.s32.totalorder %s23, %s26
    %p32 = scmp.eq.s32.totalorder %s13, 0
    %p33 = por %p31, %p32
    %p34 = scmp.ne.s32.totalorder %s23, %s26
    %p35 = scmp.eq.s32.totalorder %s18, 1
    %p36 = por %p34, %p35
    %p37 = scmp.ne.s32.totalorder %s26, %s27
    %p38 = scmp.eq.s32.totalorder %s18, 0
    %p39 = por %p37, %p38
    %p40 = scmp.ne.s32.totalorder %s26, %s27
    %p41 = scmp.eq.s32.totalorder %s19, 1
    %p42 = por %p40, %p41
    %p44 = scmp.ne.s32.totalorder %s27, %s43
    %p45 = scmp.eq.s32.totalorder %s19, 0
    %p46 = por %p44, %p45
    %s47 = ssub.s32 %s13, %s20
    %p48 = scmp.eq.s32.totalorder %s47, 0
    %s50 = sadd.s32 %s49, 1
    %s51 = scalar_select %p48, %s49, %s50
    %p54 = pneg %p48
    %p55 = scmp.eq.s32.totalorder %s13, 1
    %p56 = por %p54, %p55
    %p57 = scmp.ne.s32.totalorder %s49, %s52
    %p58 = scmp.eq.s32.totalorder %s13, 0
    %p59 = por %p57, %p58
    %p60 = scmp.ne.s32.totalorder %s49, %s52
    %p61 = scmp.eq.s32.totalorder %s18, 1
    %p62 = por %p60, %p61
    %p63 = scmp.ne.s32.totalorder %s52, %s53
    %p64 = scmp.eq.s32.totalorder %s18, 0
    %p65 = por %p63, %p64
    %p66 = scmp.ne.s32.totalorder %s52, %s53
    %p67 = scmp.eq.s32.totalorder %s19, 1
    %p68 = por %p66, %p67
    %p70 = scmp.ne.s32.totalorder %s53, %s69
    %p71 = scmp.eq.s32.totalorder %s19, 0
    %p72 = por %p70, %p71
    %s74 = sadd.s32 %s73, 1
    %p77 = scmp.eq.s32.totalorder %s13, 1
    %p78 = scmp.ne.s32.totalorder %s73, %s75
    %p79 = scmp.eq.s32.totalorder %s13, 0
    %p80 = por %p78, %p79
    %p81 = scmp.ne.s32.totalorder %s73, %s75
    %p82 = scmp.eq.s32.totalorder %s18, 1
    %p83 = por %p81, %p82
    %p84 = scmp.ne.s32.totalorder %s75, %s76
    %p85 = scmp.eq.s32.totalorder %s18, 0
    %p86 = por %p84, %p85
    %p87 = scmp.ne.s32.totalorder %s75, %s76
    %p88 = scmp.eq.s32.totalorder %s19, 1
    %p89 = por %p87, %p88
    %p91 = scmp.ne.s32.totalorder %s76, %s90
    %p92 = scmp.eq.s32.totalorder %s19, 0
    %p93 = por %p91, %p92
    %s95 = sadd.s32 %s94, 1
    %p98 = scmp.eq.s32.totalorder %s13, 1
    %p99 = scmp.ne.s32.totalorder %s94, %s96
    %p100 = scmp.eq.s32.totalorder %s13, 0
    %p101 = por %p99, %p100
    %p102 = scmp.ne.s32.totalorder %s94, %s96
    %p103 = scmp.eq.s32.totalorder %s18, 1
    %p104 = por %p102, %p103
    %p105 = scmp.ne.s32.totalorder %s96, %s97
    %p106 = scmp.eq.s32.totalorder %s18, 0
    %p107 = por %p105, %p106
    %p108 = scmp.ne.s32.totalorder %s96, %s97
    %p109 = scmp.eq.s32.totalorder %s19, 1
    %p110 = por %p108, %p109
    %p112 = scmp.ne.s32.totalorder %s97, %s111
    %p113 = scmp.eq.s32.totalorder %s19, 0
    %p114 = por %p112, %p113
    %s116 = sadd.s32 %s115, 1
    %p119 = scmp.eq.s32.totalorder %s13, 1
    %p120 = scmp.ne.s32.totalorder %s115, %s117
    %p121 = scmp.eq.s32.totalorder %s13, 0
    %p122 = por %p120, %p121
    %p123 = scmp.ne.s32.totalorder %s115, %s117
    %p124 = scmp.eq.s32.totalorder %s18, 1
    %p125 = por %p123, %p124
    %p126 = scmp.ne.s32.totalorder %s117, %s118
    %p127 = scmp.eq.s32.totalorder %s18, 0
    %p128 = por %p126, %p127
    %p129 = scmp.ne.s32.totalorder %s117, %s118
    %p130 = scmp.eq.s32.totalorder %s19, 1
    %p131 = por %p129, %p130
    %p133 = scmp.ne.s32.totalorder %s118, %s132
    %p134 = scmp.eq.s32.totalorder %s19, 0
    %p135 = por %p133, %p134
    %s137 = sadd.s32 %s136, 1
    %p140 = scmp.eq.s32.totalorder %s13, 1
    %p141 = scmp.ne.s32.totalorder %s136, %s138
    %p142 = scmp.eq.s32.totalorder %s13, 0
    %p143 = por %p141, %p142
    %p144 = scmp.ne.s32.totalorder %s136, %s138
    %p145 = scmp.eq.s32.totalorder %s18, 1
    %p146 = por %p144, %p145
    %p147 = scmp.ne.s32.totalorder %s138, %s139
    %p148 = scmp.eq.s32.totalorder %s18, 0
    %p149 = por %p147, %p148
    %p150 = scmp.ne.s32.totalorder %s138, %s139
    %p151 = scmp.eq.s32.totalorder %s19, 1
    %p152 = por %p150, %p151
    %p154 = scmp.ne.s32.totalorder %s139, %s153
    %p155 = scmp.eq.s32.totalorder %s19, 0
    %p156 = por %p154, %p155
    %s158 = sadd.s32 %s157, 1
    %p161 = scmp.eq.s32.totalorder %s13, 1
    %p162 = scmp.ne.s32.totalorder %s157, %s159
    %p163 = scmp.eq.s32.totalorder %s13, 0
    %p164 = por %p162, %p163
    %p165 = scmp.ne.s32.totalorder %s157, %s159
    %p166 = scmp.eq.s32.totalorder %s18, 1
    %p167 = por %p165, %p166
    %p168 = scmp.ne.s32.totalorder %s159, %s160
    %p169 = scmp.eq.s32.totalorder %s18, 0
    %p170 = por %p168, %p169
    %p171 = scmp.ne.s32.totalorder %s159, %s160
    %p172 = scmp.eq.s32.totalorder %s19, 1
    %p173 = por %p171, %p172
    %p175 = scmp.ne.s32.totalorder %s160, %s174
    %p176 = scmp.eq.s32.totalorder %s19, 0
    %p177 = por %p175, %p176
    %s178 = ssub.s32 %s13, %s20
    %p179 = scmp.eq.s32.totalorder %s178, 0
    %s181 = sadd.s32 %s180, 1
    %s182 = scalar_select %p179, %s180, %s181
    %p185 = pneg %p179
    %p186 = scmp.eq.s32.totalorder %s13, 1
    %p187 = por %p185, %p186
    %p188 = scmp.ne.s32.totalorder %s180, %s183
    %p189 = scmp.eq.s32.totalorder %s13, 0
    %p190 = por %p188, %p189
    %p191 = scmp.ne.s32.totalorder %s180, %s183
    %p192 = scmp.eq.s32.totalorder %s18, 1
    %p193 = por %p191, %p192
    %p194 = scmp.ne.s32.totalorder %s183, %s184
    %p195 = scmp.eq.s32.totalorder %s18, 0
    %p196 = por %p194, %p195
    %p197 = scmp.ne.s32.totalorder %s183, %s184
    %p198 = scmp.eq.s32.totalorder %s19, 1
    %p199 = por %p197, %p198
    %p201 = scmp.ne.s32.totalorder %s184, %s200
    %p202 = scmp.eq.s32.totalorder %s19, 0
    %p203 = por %p201, %p202
    %p204 = scmp.le.s32.totalorder 1, %s13
    %p205 = scmp.lt.s32.totalorder %s13, 3
    %p206 = pnand %p204, %p205
    %p207 = pneg %p206
    // Predicated region
    $region9: #{distribute_forward_nhwc.1} parent=5 // pred_check
      _
    $region10: #{distribute_forward_nhwc.1} parent=5 // pred_check_branch
      %209 = sbr.rel (%p206) target = $region12
    $region11: #{distribute_forward_nhwc.1} parent=5 // pred_region
      %s210 = ssub.s32 %s13, 1
      // Predicated region
      $region13: #{distribute_forward_nhwc.1} parent=11 // pred_check
        %p211 = pneg %p86
      $region14: #{distribute_forward_nhwc.1} parent=11 // pred_check_branch
        %213 = sbr.rel (%p211) target = $region16
      $region15: #{distribute_forward_nhwc.1} parent=11 // pred_region
        _
      $region16: #{distribute_forward_nhwc.1} parent=11 // pred_fallthru
        _
      // Predicated region
      $region17: #{distribute_forward_nhwc.1} parent=11 // pred_check
        %p214 = pneg %p107
      $region18: #{distribute_forward_nhwc.1} parent=11 // pred_check_branch
        %216 = sbr.rel (%p214) target = $region20
      $region19: #{distribute_forward_nhwc.1} parent=11 // pred_region
        _
      $region20: #{distribute_forward_nhwc.1} parent=11 // pred_fallthru
        _
      // Predicated region
      $region21: #{distribute_forward_nhwc.1} parent=11 // pred_check
        %p217 = pneg %p128
      $region22: #{distribute_forward_nhwc.1} parent=11 // pred_check_branch
        %219 = sbr.rel (%p217) target = $region24
      $region23: #{distribute_forward_nhwc.1} parent=11 // pred_region
        _
      $region24: #{distribute_forward_nhwc.1} parent=11 // pred_fallthru
        _
      // Predicated region
      $region25: #{distribute_forward_nhwc.1} parent=11 // pred_check
        %p220 = pneg %p149
      $region26: #{distribute_forward_nhwc.1} parent=11 // pred_check_branch
        %222 = sbr.rel (%p220) target = $region28
      $region27: #{distribute_forward_nhwc.1} parent=11 // pred_region
        _
      $region28: #{distribute_forward_nhwc.1} parent=11 // pred_fallthru
        _
      // Predicated region
      $region29: #{distribute_forward_nhwc.1} parent=11 // pred_check
        %p223 = pneg %p170
      $region30: #{distribute_forward_nhwc.1} parent=11 // pred_check_branch
        %225 = sbr.rel (%p223) target = $region32
      $region31: #{distribute_forward_nhwc.1} parent=11 // pred_region
        _
      $region32: #{distribute_forward_nhwc.1} parent=11 // pred_fallthru
        _
    $region12: #{distribute_forward_nhwc.1} parent=5 // pred_fallthru
      _
    %p226 = scmp.lt.s32.totalorder %s13, 2
    // Predicated region
    $region33: #{distribute_forward_nhwc.1} parent=5 // pred_check
      %p227 = pneg %p226
    $region34: #{distribute_forward_nhwc.1} parent=5 // pred_check_branch
      %229 = sbr.rel (%p227) target = $region36
    $region35: #{distribute_forward_nhwc.1} parent=5 // pred_region
      // Predicated region
      $region37: #{distribute_forward_nhwc.1} parent=35 // pred_check
        %p230 = pneg %p33
      $region38: #{distribute_forward_nhwc.1} parent=35 // pred_check_branch
        %232 = sbr.rel (%p230) target = $region40
      $region39: #{distribute_forward_nhwc.1} parent=35 // pred_region
        %s233 = smul.u32 32, %s13
        %p234 = scmp.lt.s32.totalorder %s233, 63
        %s235 = scalar_select %p234, %s233, 63
        %s236 = smul.addr %s235, 4
        %s237 = scalar_lea.vmem %s0, %s236
        %s238 = smul.u32 32, %s13
      $region40: #{distribute_forward_nhwc.1} parent=35 // pred_fallthru
        _
      // Predicated region
      $region41: #{distribute_forward_nhwc.1} parent=35 // pred_check
        %p239 = pneg %p59
      $region42: #{distribute_forward_nhwc.1} parent=35 // pred_check_branch
        %241 = sbr.rel (%p239) target = $region44
      $region43: #{distribute_forward_nhwc.1} parent=35 // pred_region
        %s242 = smul.u32 32, %s13
        %p243 = scmp.lt.s32.totalorder %s242, 63
        %s244 = scalar_select %p243, %s242, 63
        %s245 = smul.addr %s244, 4
        %s246 = scalar_lea.vmem %s1, %s245
        %s247 = smul.u32 32, %s13
      $region44: #{distribute_forward_nhwc.1} parent=35 // pred_fallthru
        _
    $region36: #{distribute_forward_nhwc.1} parent=5 // pred_fallthru
      _
    %p248 = scmp.le.s32.totalorder 1, %s13
    %p249 = scmp.lt.s32.totalorder %s13, 3
    %p250 = pnand %p248, %p249
    %p251 = pneg %p250
    // Predicated region
    $region45: #{distribute_forward_nhwc.1} parent=5 // pred_check
      _
    $region46: #{distribute_forward_nhwc.1} parent=5 // pred_check_branch
      %253 = sbr.rel (%p250) target = $region48
    $region47: #{distribute_forward_nhwc.1} parent=5 // pred_region
      %s254 = ssub.s32 %s13, 1
      %s255 = smul.u32 32, %s18
      %p256 = scmp.lt.s32.totalorder %s255, 63
      %s257 = scalar_select %p256, %s255, 63
      %s258 = smul.addr %s257, 4
      %s259 = scalar_lea.vmem %s0, %s258
      %p260 = pneg %p39
      %p261 = pneg %p36
      %s262 = smul.u32 32, %s18
      %p263 = scmp.lt.s32.totalorder %s262, 63
      %s264 = scalar_select %p263, %s262, 63
      %s265 = smul.addr %s264, 4
      %s266 = scalar_lea.vmem %s1, %s265
      %p267 = pneg %p65
      %p268 = pneg %p62
      %p269 = pneg %p86
      %p270 = pneg %p83
      %p271 = pneg %p107
      %p272 = pneg %p104
      %p273 = pneg %p128
      %p274 = pneg %p125
      %p275 = pneg %p149
      %p276 = pneg %p146
      %p277 = pneg %p170
      %p278 = pneg %p167
      %p279 = pneg %p196
      %p280 = pneg %p193
      %s281 = smul.u32 32, %s18
      %p282 = scmp.lt.s32.totalorder %s281, 63
      %s283 = scalar_select %p282, %s281, 63
      %s284 = smul.addr %s283, 4
      %s285 = scalar_lea.vmem %s7, %s284
      %s286 = smul.u32 32, %s18
      %p287 = scmp.lt.s32.totalorder %s286, 63
      %s288 = scalar_select %p287, %s286, 63
      %s289 = smul.addr %s288, 4
      %s290 = scalar_lea.vmem %s0, %s289
      %s291 = smul.u32 32, %s18
      %s292 = smul.u32 32, %s18
      %p293 = scmp.lt.s32.totalorder %s292, 63
      %s294 = scalar_select %p293, %s292, 63
      %s295 = smul.addr %s294, 4
      %s296 = scalar_lea.vmem %s1, %s295
      %s297 = smul.u32 32, %s18
      %s298 = smul.u32 32, %s18
      %p299 = scmp.lt.s32.totalorder %s298, 63
      %s300 = scalar_select %p299, %s298, 63
      %s301 = smul.addr %s300, 4
      %s302 = scalar_lea.vmem %s7, %s301
      %s303 = smul.u32 32, %s18
      %v305 = vld [vmem:[%s290] sm:$0xf]
      %v306 = vld [vmem:[%s290 + $0x4] sm:$0xf]
      %v307 = vld [vmem:[%s290 + $0x8] sm:$0xf]
      %v308 = vld [vmem:[%s290 + $0xc] sm:$0xf]
      %v309 = vld [vmem:[%s290 + $0x10] sm:$0xf]
      %v310 = vld [vmem:[%s290 + $0x14] sm:$0xf]
      %v311 = vld [vmem:[%s290 + $0x18] sm:$0xf]
      %v312 = vld [vmem:[%s290 + $0x1c] sm:$0xf]
      %v313 = vld [vmem:[%s290 + $0x20] sm:$0xf]
      %v314 = vld [vmem:[%s290 + $0x24] sm:$0xf]
      %v315 = vld [vmem:[%s290 + $0x28] sm:$0xf]
      %v316 = vld [vmem:[%s290 + $0x2c] sm:$0xf]
      %v317 = vld [vmem:[%s290 + $0x30] sm:$0xf]
      %v318 = vld [vmem:[%s290 + $0x34] sm:$0xf]
      %v319 = vld [vmem:[%s290 + $0x38] sm:$0xf]
      %v320 = vld [vmem:[%s290 + $0x3c] sm:$0xf]
      %v321 = vld [vmem:[%s290 + $0x40] sm:$0xf]
      %v322 = vld [vmem:[%s290 + $0x44] sm:$0xf]
      %v323 = vld [vmem:[%s290 + $0x48] sm:$0xf]
      %v324 = vld [vmem:[%s290 + $0x4c] sm:$0xf]
      %v325 = vld [vmem:[%s290 + $0x50] sm:$0xf]
      %v326 = vld [vmem:[%s290 + $0x54] sm:$0xf]
      %v327 = vld [vmem:[%s290 + $0x58] sm:$0xf]
      %v328 = vld [vmem:[%s290 + $0x5c] sm:$0xf]
      %v329 = vld [vmem:[%s290 + $0x60] sm:$0xf]
      %v330 = vld [vmem:[%s290 + $0x64] sm:$0xf]
      %v331 = vld [vmem:[%s290 + $0x68] sm:$0xf]
      %v332 = vld [vmem:[%s290 + $0x6c] sm:$0xf]
      %v333 = vld [vmem:[%s290 + $0x70] sm:$0xf]
      %v334 = vld [vmem:[%s290 + $0x74] sm:$0xf]
      %v335 = vld [vmem:[%s290 + $0x78] sm:$0xf]
      %v336 = vld [vmem:[%s290 + $0x7c] sm:$0xf]
      %v337 = vld [vmem:[%s2] sm:$0x3]
      %v338 = vld [vmem:[%s3] sm:$0x1]
      %v340 = vperm.slane %v338, 0
      %v374 = vunpack.c.l.b16 %v305
      %v375 = vunpack.c.l.b16 %v306
      %v376 = vunpack.c.l.b16 %v307
      %v377 = vunpack.c.l.b16 %v308
      %v378 = vunpack.c.l.b16 %v309
      %v379 = vunpack.c.l.b16 %v310
      %v380 = vunpack.c.l.b16 %v311
      %v381 = vunpack.c.l.b16 %v312
      %v382 = vunpack.c.l.b16 %v313
      %v383 = vunpack.c.l.b16 %v314
      %v384 = vunpack.c.l.b16 %v315
      %v385 = vunpack.c.l.b16 %v316
      %v386 = vunpack.c.l.b16 %v317
      %v387 = vunpack.c.l.b16 %v318
      %v388 = vunpack.c.l.b16 %v319
      %v389 = vunpack.c.l.b16 %v320
      %v390 = vunpack.c.l.b16 %v321
      %v391 = vunpack.c.l.b16 %v322
      %v392 = vunpack.c.l.b16 %v323
      %v393 = vunpack.c.l.b16 %v324
      %v394 = vunpack.c.l.b16 %v325
      %v395 = vunpack.c.l.b16 %v326
      %v396 = vunpack.c.l.b16 %v327
      %v397 = vunpack.c.l.b16 %v328
      %v398 = vunpack.c.l.b16 %v329
      %v399 = vunpack.c.l.b16 %v330
      %v400 = vunpack.c.l.b16 %v331
      %v401 = vunpack.c.l.b16 %v332
      %v402 = vunpack.c.l.b16 %v333
      %v403 = vunpack.c.l.b16 %v334
      %v404 = vunpack.c.l.b16 %v335
      %v405 = vunpack.c.l.b16 %v336
      %v406 = vpack.c.b16 %v375, %v374
      %v407 = vpack.c.b16 %v377, %v376
      %v408 = vpack.c.b16 %v379, %v378
      %v409 = vpack.c.b16 %v381, %v380
      %v410 = vpack.c.b16 %v383, %v382
      %v411 = vpack.c.b16 %v385, %v384
      %v412 = vpack.c.b16 %v387, %v386
      %v413 = vpack.c.b16 %v389, %v388
      %v414 = vpack.c.b16 %v391, %v390
      %v415 = vpack.c.b16 %v393, %v392
      %v416 = vpack.c.b16 %v395, %v394
      %v417 = vpack.c.b16 %v397, %v396
      %v418 = vpack.c.b16 %v399, %v398
      %v419 = vpack.c.b16 %v401, %v400
      %v420 = vpack.c.b16 %v403, %v402
      %v421 = vpack.c.b16 %v405, %v404
      %vm422 = vcmask 31744
      %v424 = vsel %vm422, %v406, 0
      %v427 = vsel %vm422, %v407, 0
      %v430 = vsel %vm422, %v408, 0
      %v433 = vsel %vm422, %v409, 0
      %v436 = vsel %vm422, %v410, 0
      %v439 = vsel %vm422, %v411, 0
      %v442 = vsel %vm422, %v412, 0
      %v445 = vsel %vm422, %v413, 0
      %v448 = vsel %vm422, %v414, 0
      %v451 = vsel %vm422, %v415, 0
      %v454 = vsel %vm422, %v416, 0
      %v457 = vsel %vm422, %v417, 0
      %v460 = vsel %vm422, %v418, 0
      %v463 = vsel %vm422, %v419, 0
      %v466 = vsel %vm422, %v420, 0
      %v469 = vsel %vm422, %v421, 0
      %vm471 = vcmask 1041408
      %v473 = vsel %vm471, %v337, 0
      %475 = vmatpush.bf16.msra.mxu0 0
      %476 = vmatpush.bf16.msra.mxu0 0
      %477 = vmatpush.bf16.msra.mxu0 0
      %478 = vmatpush.bf16.msra.mxu0 0
      %479 = vmatpush.bf16.msra.mxu0 0
      %480 = vmatpush.bf16.msra.mxu0 0
      %481 = vmatpush.bf16.msra.mxu0 0
      %482 = vmatpush.bf16.msra.mxu0 %v473
      %483 = vmatmul.bf16.gmra.mxu0 %v424
      %v484 = vpop.f32.mrf.mxu0
      %v485 = vadd.f32 %v340, %v484
      %v486 = vpop.f32.mrf.mxu0
      %v487 = vadd.f32 %v340, %v486
      %488 = vmatmul.bf16.gmra.mxu0 %v427
      %v489 = vpop.f32.mrf.mxu0
      %v490 = vadd.f32 %v340, %v489
      %v491 = vpop.f32.mrf.mxu0
      %v492 = vadd.f32 %v340, %v491
      %493 = vmatmul.bf16.gmra.mxu0 %v430
      %v494 = vpop.f32.mrf.mxu0
      %v495 = vadd.f32 %v340, %v494
      %v496 = vpop.f32.mrf.mxu0
      %v497 = vadd.f32 %v340, %v496
      %498 = vmatmul.bf16.gmra.mxu0 %v433
      %v499 = vpop.f32.mrf.mxu0
      %v500 = vadd.f32 %v340, %v499
      %v501 = vpop.f32.mrf.mxu0
      %v502 = vadd.f32 %v340, %v501
      %503 = vmatmul.bf16.gmra.mxu0 %v436
      %v504 = vpop.f32.mrf.mxu0
      %v505 = vadd.f32 %v340, %v504
      %v506 = vpop.f32.mrf.mxu0
      %v507 = vadd.f32 %v340, %v506
      %508 = vmatmul.bf16.gmra.mxu0 %v439
      %v509 = vpop.f32.mrf.mxu0
      %v510 = vadd.f32 %v340, %v509
      %v511 = vpop.f32.mrf.mxu0
      %v512 = vadd.f32 %v340, %v511
      %513 = vmatmul.bf16.gmra.mxu0 %v442
      %v514 = vpop.f32.mrf.mxu0
      %v515 = vadd.f32 %v340, %v514
      %v516 = vpop.f32.mrf.mxu0
      %v517 = vadd.f32 %v340, %v516
      %518 = vmatmul.bf16.gmra.mxu0 %v445
      %v519 = vpop.f32.mrf.mxu0
      %v520 = vadd.f32 %v340, %v519
      %v521 = vpop.f32.mrf.mxu0
      %v522 = vadd.f32 %v340, %v521
      %523 = vmatmul.bf16.gmra.mxu0 %v448
      %v524 = vpop.f32.mrf.mxu0
      %v525 = vadd.f32 %v340, %v524
      %v526 = vpop.f32.mrf.mxu0
      %v527 = vadd.f32 %v340, %v526
      %528 = vmatmul.bf16.gmra.mxu0 %v451
      %v529 = vpop.f32.mrf.mxu0
      %v530 = vadd.f32 %v340, %v529
      %v531 = vpop.f32.mrf.mxu0
      %v532 = vadd.f32 %v340, %v531
      %533 = vmatmul.bf16.gmra.mxu0 %v454
      %v534 = vpop.f32.mrf.mxu0
      %v535 = vadd.f32 %v340, %v534
      %v536 = vpop.f32.mrf.mxu0
      %v537 = vadd.f32 %v340, %v536
      %538 = vmatmul.bf16.gmra.mxu0 %v457
      %v539 = vpop.f32.mrf.mxu0
      %v540 = vadd.f32 %v340, %v539
      %v541 = vpop.f32.mrf.mxu0
      %v542 = vadd.f32 %v340, %v541
      %543 = vmatmul.bf16.gmra.mxu0 %v460
      %v544 = vpop.f32.mrf.mxu0
      %v545 = vadd.f32 %v340, %v544
      %v546 = vpop.f32.mrf.mxu0
      %v547 = vadd.f32 %v340, %v546
      %548 = vmatmul.bf16.gmra.mxu0 %v463
      %v549 = vpop.f32.mrf.mxu0
      %v550 = vadd.f32 %v340, %v549
      %v551 = vpop.f32.mrf.mxu0
      %v552 = vadd.f32 %v340, %v551
      %553 = vmatmul.bf16.gmra.mxu0 %v466
      %v554 = vpop.f32.mrf.mxu0
      %v555 = vadd.f32 %v340, %v554
      %v556 = vpop.f32.mrf.mxu0
      %v557 = vadd.f32 %v340, %v556
      %558 = vmatmul.bf16.gmra.mxu0 %v469
      %v559 = vpop.f32.mrf.mxu0
      %v560 = vadd.f32 %v340, %v559
      %v561 = vpop.f32.mrf.mxu0
      %v562 = vadd.f32 %v340, %v561
      %563 = vdwg.mxu0
      %v564 = vxor.u32 %v485, 2147483648
      %v565 = vxor.u32 %v487, 2147483648
      %v566 = vxor.u32 %v490, 2147483648
      %v567 = vxor.u32 %v492, 2147483648
      %v568 = vxor.u32 %v495, 2147483648
      %v569 = vxor.u32 %v497, 2147483648
      %v570 = vxor.u32 %v500, 2147483648
      %v571 = vxor.u32 %v502, 2147483648
      %v572 = vxor.u32 %v505, 2147483648
      %v573 = vxor.u32 %v507, 2147483648
      %v574 = vxor.u32 %v510, 2147483648
      %v575 = vxor.u32 %v512, 2147483648
      %v576 = vxor.u32 %v515, 2147483648
      %v577 = vxor.u32 %v517, 2147483648
      %v578 = vxor.u32 %v520, 2147483648
      %v579 = vxor.u32 %v522, 2147483648
      %v580 = vxor.u32 %v525, 2147483648
      %v581 = vxor.u32 %v527, 2147483648
      %v582 = vxor.u32 %v530, 2147483648
      %v583 = vxor.u32 %v532, 2147483648
      %v584 = vxor.u32 %v535, 2147483648
      %v585 = vxor.u32 %v537, 2147483648
      %v586 = vxor.u32 %v540, 2147483648
      %v587 = vxor.u32 %v542, 2147483648
      %v588 = vxor.u32 %v545, 2147483648
      %v589 = vxor.u32 %v547, 2147483648
      %v590 = vxor.u32 %v550, 2147483648
      %v591 = vxor.u32 %v552, 2147483648
      %v592 = vxor.u32 %v555, 2147483648
      %v593 = vxor.u32 %v557, 2147483648
      %v594 = vxor.u32 %v560, 2147483648
      %v595 = vxor.u32 %v562, 2147483648
      %v596 = vmul.f32 %v564, 1.442695
      %v597 = vpow.pop %v596
      %v598 = vmul.f32 %v565, 1.442695
      %v599 = vpow.pop %v598
      %v600 = vmul.f32 %v566, 1.442695
      %v601 = vpow.pop %v600
      %v602 = vmul.f32 %v567, 1.442695
      %v603 = vpow.pop %v602
      %v604 = vmul.f32 %v568, 1.442695
      %v605 = vpow.pop %v604
      %v606 = vmul.f32 %v569, 1.442695
      %v607 = vpow.pop %v606
      %v608 = vmul.f32 %v570, 1.442695
      %v609 = vpow.pop %v608
      %v610 = vmul.f32 %v571, 1.442695
      %v611 = vpow.pop %v610
      %v612 = vmul.f32 %v572, 1.442695
      %v613 = vpow.pop %v612
      %v614 = vmul.f32 %v573, 1.442695
      %v615 = vpow.pop %v614
      %v616 = vmul.f32 %v574, 1.442695
      %v617 = vpow.pop %v616
      %v618 = vmul.f32 %v575, 1.442695
      %v619 = vpow.pop %v618
      %v620 = vmul.f32 %v576, 1.442695
      %v621 = vpow.pop %v620
      %v622 = vmul.f32 %v577, 1.442695
      %v623 = vpow.pop %v622
      %v624 = vmul.f32 %v578, 1.442695
      %v625 = vpow.pop %v624
      %v626 = vmul.f32 %v579, 1.442695
      %v627 = vpow.pop %v626
      %v628 = vmul.f32 %v580, 1.442695
      %v629 = vpow.pop %v628
      %v630 = vmul.f32 %v581, 1.442695
      %v631 = vpow.pop %v630
      %v632 = vmul.f32 %v582, 1.442695
      %v633 = vpow.pop %v632
      %v634 = vmul.f32 %v583, 1.442695
      %v635 = vpow.pop %v634
      %v636 = vmul.f32 %v584, 1.442695
      %v637 = vpow.pop %v636
      %v638 = vmul.f32 %v585, 1.442695
      %v639 = vpow.pop %v638
      %v640 = vmul.f32 %v586, 1.442695
      %v641 = vpow.pop %v640
      %v642 = vmul.f32 %v587, 1.442695
      %v643 = vpow.pop %v642
      %v644 = vmul.f32 %v588, 1.442695
      %v645 = vpow.pop %v644
      %v646 = vmul.f32 %v589, 1.442695
      %v647 = vpow.pop %v646
      %v648 = vmul.f32 %v590, 1.442695
      %v649 = vpow.pop %v648
      %v650 = vmul.f32 %v591, 1.442695
      %v651 = vpow.pop %v650
      %v652 = vmul.f32 %v592, 1.442695
      %v653 = vpow.pop %v652
      %v654 = vmul.f32 %v593, 1.442695
      %v655 = vpow.pop %v654
      %v656 = vmul.f32 %v594, 1.442695
      %v657 = vpow.pop %v656
      %v658 = vmul.f32 %v595, 1.442695
      %v659 = vpow.pop %v658
      %v660 = vadd.f32 %v597, 1.0
      %v661 = vadd.f32 %v599, 1.0
      %v662 = vadd.f32 %v601, 1.0
      %v663 = vadd.f32 %v603, 1.0
      %v664 = vadd.f32 %v605, 1.0
      %v665 = vadd.f32 %v607, 1.0
      %v666 = vadd.f32 %v609, 1.0
      %v667 = vadd.f32 %v611, 1.0
      %v668 = vadd.f32 %v613, 1.0
      %v669 = vadd.f32 %v615, 1.0
      %v670 = vadd.f32 %v617, 1.0
      %v671 = vadd.f32 %v619, 1.0
      %v672 = vadd.f32 %v621, 1.0
      %v673 = vadd.f32 %v623, 1.0
      %v674 = vadd.f32 %v625, 1.0
      %v675 = vadd.f32 %v627, 1.0
      %v676 = vadd.f32 %v629, 1.0
      %v677 = vadd.f32 %v631, 1.0
      %v678 = vadd.f32 %v633, 1.0
      %v679 = vadd.f32 %v635, 1.0
      %v680 = vadd.f32 %v637, 1.0
      %v681 = vadd.f32 %v639, 1.0
      %v682 = vadd.f32 %v641, 1.0
      %v683 = vadd.f32 %v643, 1.0
      %v684 = vadd.f32 %v645, 1.0
      %v685 = vadd.f32 %v647, 1.0
      %v686 = vadd.f32 %v649, 1.0
      %v687 = vadd.f32 %v651, 1.0
      %v688 = vadd.f32 %v653, 1.0
      %v689 = vadd.f32 %v655, 1.0
      %v690 = vadd.f32 %v657, 1.0
      %v691 = vadd.f32 %v659, 1.0
      %v692 = vrcp.pop %v660
      %v693 = vmul.f32 %v660, %v692
      %v694 = vsub.f32 1.0, %v693
      %v695 = vmul.f32 %v692, %v694
      %v696 = vadd.f32 %v692, %v695
      %vm697 = vweird.f32 %v660
      %vm698 = vweird.f32 %v692
      %vm699 = vmor %vm697, %vm698
      %v700 = vsel %vm699, %v692, %v696
      %v701 = vand.u32 2147483647, %v660
      %vm702 = vcmp.eq.f32.partialorder %v701, 8.507059e+37
      %v703 = vand.u32 %v660, 2147483648
      %v704 = vor.u32 1.1754944e-38, %v703
      %v705 = vsel %vm702, %v704, %v700
      %v706 = vmul.f32 1.0, %v705
      %v707 = vrcp.pop %v661
      %v708 = vmul.f32 %v661, %v707
      %v709 = vsub.f32 1.0, %v708
      %v710 = vmul.f32 %v707, %v709
      %v711 = vadd.f32 %v707, %v710
      %vm712 = vweird.f32 %v661
      %vm713 = vweird.f32 %v707
      %vm714 = vmor %vm712, %vm713
      %v715 = vsel %vm714, %v707, %v711
      %v716 = vand.u32 2147483647, %v661
      %vm717 = vcmp.eq.f32.partialorder %v716, 8.507059e+37
      %v718 = vand.u32 %v661, 2147483648
      %v719 = vor.u32 1.1754944e-38, %v718
      %v720 = vsel %vm717, %v719, %v715
      %v721 = vmul.f32 1.0, %v720
      %v722 = vrcp.pop %v662
      %v723 = vmul.f32 %v662, %v722
      %v724 = vsub.f32 1.0, %v723
      %v725 = vmul.f32 %v722, %v724
      %v726 = vadd.f32 %v722, %v725
      %vm727 = vweird.f32 %v662
      %vm728 = vweird.f32 %v722
      %vm729 = vmor %vm727, %vm728
      %v730 = vsel %vm729, %v722, %v726
      %v731 = vand.u32 2147483647, %v662
      %vm732 = vcmp.eq.f32.partialorder %v731, 8.507059e+37
      %v733 = vand.u32 %v662, 2147483648
      %v734 = vor.u32 1.1754944e-38, %v733
      %v735 = vsel %vm732, %v734, %v730
      %v736 = vmul.f32 1.0, %v735
      %v737 = vrcp.pop %v663
      %v738 = vmul.f32 %v663, %v737
      %v739 = vsub.f32 1.0, %v738
      %v740 = vmul.f32 %v737, %v739
      %v741 = vadd.f32 %v737, %v740
      %vm742 = vweird.f32 %v663
      %vm743 = vweird.f32 %v737
      %vm744 = vmor %vm742, %vm743
      %v745 = vsel %vm744, %v737, %v741
      %v746 = vand.u32 2147483647, %v663
      %vm747 = vcmp.eq.f32.partialorder %v746, 8.507059e+37
      %v748 = vand.u32 %v663, 2147483648
      %v749 = vor.u32 1.1754944e-38, %v748
      %v750 = vsel %vm747, %v749, %v745
      %v751 = vmul.f32 1.0, %v750
      %v752 = vrcp.pop %v664
      %v753 = vmul.f32 %v664, %v752
      %v754 = vsub.f32 1.0, %v753
      %v755 = vmul.f32 %v752, %v754
      %v756 = vadd.f32 %v752, %v755
      %vm757 = vweird.f32 %v664
      %vm758 = vweird.f32 %v752
      %vm759 = vmor %vm757, %vm758
      %v760 = vsel %vm759, %v752, %v756
      %v761 = vand.u32 2147483647, %v664
      %vm762 = vcmp.eq.f32.partialorder %v761, 8.507059e+37
      %v763 = vand.u32 %v664, 2147483648
      %v764 = vor.u32 1.1754944e-38, %v763
      %v765 = vsel %vm762, %v764, %v760
      %v766 = vmul.f32 1.0, %v765
      %v767 = vrcp.pop %v665
      %v768 = vmul.f32 %v665, %v767
      %v769 = vsub.f32 1.0, %v768
      %v770 = vmul.f32 %v767, %v769
      %v771 = vadd.f32 %v767, %v770
      %vm772 = vweird.f32 %v665
      %vm773 = vweird.f32 %v767
      %vm774 = vmor %vm772, %vm773
      %v775 = vsel %vm774, %v767, %v771
      %v776 = vand.u32 2147483647, %v665
      %vm777 = vcmp.eq.f32.partialorder %v776, 8.507059e+37
      %v778 = vand.u32 %v665, 2147483648
      %v779 = vor.u32 1.1754944e-38, %v778
      %v780 = vsel %vm777, %v779, %v775
      %v781 = vmul.f32 1.0, %v780
      %v782 = vrcp.pop %v666
      %v783 = vmul.f32 %v666, %v782
      %v784 = vsub.f32 1.0, %v783
      %v785 = vmul.f32 %v782, %v784
      %v786 = vadd.f32 %v782, %v785
      %vm787 = vweird.f32 %v666
      %vm788 = vweird.f32 %v782
      %vm789 = vmor %vm787, %vm788
      %v790 = vsel %vm789, %v782, %v786
      %v791 = vand.u32 2147483647, %v666
      %vm792 = vcmp.eq.f32.partialorder %v791, 8.507059e+37
      %v793 = vand.u32 %v666, 2147483648
      %v794 = vor.u32 1.1754944e-38, %v793
      %v795 = vsel %vm792, %v794, %v790
      %v796 = vmul.f32 1.0, %v795
      %v797 = vrcp.pop %v667
      %v798 = vmul.f32 %v667, %v797
      %v799 = vsub.f32 1.0, %v798
      %v800 = vmul.f32 %v797, %v799
      %v801 = vadd.f32 %v797, %v800
      %vm802 = vweird.f32 %v667
      %vm803 = vweird.f32 %v797
      %vm804 = vmor %vm802, %vm803
      %v805 = vsel %vm804, %v797, %v801
      %v806 = vand.u32 2147483647, %v667
      %vm807 = vcmp.eq.f32.partialorder %v806, 8.507059e+37
      %v808 = vand.u32 %v667, 2147483648
      %v809 = vor.u32 1.1754944e-38, %v808
      %v810 = vsel %vm807, %v809, %v805
      %v811 = vmul.f32 1.0, %v810
      %v812 = vrcp.pop %v668
      %v813 = vmul.f32 %v668, %v812
      %v814 = vsub.f32 1.0, %v813
      %v815 = vmul.f32 %v812, %v814
      %v816 = vadd.f32 %v812, %v815
      %vm817 = vweird.f32 %v668
      %vm818 = vweird.f32 %v812
      %vm819 = vmor %vm817, %vm818
      %v820 = vsel %vm819, %v812, %v816
      %v821 = vand.u32 2147483647, %v668
      %vm822 = vcmp.eq.f32.partialorder %v821, 8.507059e+37
      %v823 = vand.u32 %v668, 2147483648
      %v824 = vor.u32 1.1754944e-38, %v823
      %v825 = vsel %vm822, %v824, %v820
      %v826 = vmul.f32 1.0, %v825
      %v827 = vrcp.pop %v669
      %v828 = vmul.f32 %v669, %v827
      %v829 = vsub.f32 1.0, %v828
      %v830 = vmul.f32 %v827, %v829
      %v831 = vadd.f32 %v827, %v830
      %vm832 = vweird.f32 %v669
      %vm833 = vweird.f32 %v827
      %vm834 = vmor %vm832, %vm833
      %v835 = vsel %vm834, %v827, %v831
      %v836 = vand.u32 2147483647, %v669
      %vm837 = vcmp.eq.f32.partialorder %v836, 8.507059e+37
      %v838 = vand.u32 %v669, 2147483648
      %v839 = vor.u32 1.1754944e-38, %v838
      %v840 = vsel %vm837, %v839, %v835
      %v841 = vmul.f32 1.0, %v840
      %v842 = vrcp.pop %v670
      %v843 = vmul.f32 %v670, %v842
      %v844 = vsub.f32 1.0, %v843
      %v845 = vmul.f32 %v842, %v844
      %v846 = vadd.f32 %v842, %v845
      %vm847 = vweird.f32 %v670
      %vm848 = vweird.f32 %v842
      %vm849 = vmor %vm847, %vm848
      %v850 = vsel %vm849, %v842, %v846
      %v851 = vand.u32 2147483647, %v670
      %vm852 = vcmp.eq.f32.partialorder %v851, 8.507059e+37
      %v853 = vand.u32 %v670, 2147483648
      %v854 = vor.u32 1.1754944e-38, %v853
      %v855 = vsel %vm852, %v854, %v850
      %v856 = vmul.f32 1.0, %v855
      %v857 = vrcp.pop %v671
      %v858 = vmul.f32 %v671, %v857
      %v859 = vsub.f32 1.0, %v858
      %v860 = vmul.f32 %v857, %v859
      %v861 = vadd.f32 %v857, %v860
      %vm862 = vweird.f32 %v671
      %vm863 = vweird.f32 %v857
      %vm864 = vmor %vm862, %vm863
      %v865 = vsel %vm864, %v857, %v861
      %v866 = vand.u32 2147483647, %v671
      %vm867 = vcmp.eq.f32.partialorder %v866, 8.507059e+37
      %v868 = vand.u32 %v671, 2147483648
      %v869 = vor.u32 1.1754944e-38, %v868
      %v870 = vsel %vm867, %v869, %v865
      %v871 = vmul.f32 1.0, %v870
      %v872 = vrcp.pop %v672
      %v873 = vmul.f32 %v672, %v872
      %v874 = vsub.f32 1.0, %v873
      %v875 = vmul.f32 %v872, %v874
      %v876 = vadd.f32 %v872, %v875
      %vm877 = vweird.f32 %v672
      %vm878 = vweird.f32 %v872
      %vm879 = vmor %vm877, %vm878
      %v880 = vsel %vm879, %v872, %v876
      %v881 = vand.u32 2147483647, %v672
      %vm882 = vcmp.eq.f32.partialorder %v881, 8.507059e+37
      %v883 = vand.u32 %v672, 2147483648
      %v884 = vor.u32 1.1754944e-38, %v883
      %v885 = vsel %vm882, %v884, %v880
      %v886 = vmul.f32 1.0, %v885
      %v887 = vrcp.pop %v673
      %v888 = vmul.f32 %v673, %v887
      %v889 = vsub.f32 1.0, %v888
      %v890 = vmul.f32 %v887, %v889
      %v891 = vadd.f32 %v887, %v890
      %vm892 = vweird.f32 %v673
      %vm893 = vweird.f32 %v887
      %vm894 = vmor %vm892, %vm893
      %v895 = vsel %vm894, %v887, %v891
      %v896 = vand.u32 2147483647, %v673
      %vm897 = vcmp.eq.f32.partialorder %v896, 8.507059e+37
      %v898 = vand.u32 %v673, 2147483648
      %v899 = vor.u32 1.1754944e-38, %v898
      %v900 = vsel %vm897, %v899, %v895
      %v901 = vmul.f32 1.0, %v900
      %v902 = vrcp.pop %v674
      %v903 = vmul.f32 %v674, %v902
      %v904 = vsub.f32 1.0, %v903
      %v905 = vmul.f32 %v902, %v904
      %v906 = vadd.f32 %v902, %v905
      %vm907 = vweird.f32 %v674
      %vm908 = vweird.f32 %v902
      %vm909 = vmor %vm907, %vm908
      %v910 = vsel %vm909, %v902, %v906
      %v911 = vand.u32 2147483647, %v674
      %vm912 = vcmp.eq.f32.partialorder %v911, 8.507059e+37
      %v913 = vand.u32 %v674, 2147483648
      %v914 = vor.u32 1.1754944e-38, %v913
      %v915 = vsel %vm912, %v914, %v910
      %v916 = vmul.f32 1.0, %v915
      %v917 = vrcp.pop %v675
      %v918 = vmul.f32 %v675, %v917
      %v919 = vsub.f32 1.0, %v918
      %v920 = vmul.f32 %v917, %v919
      %v921 = vadd.f32 %v917, %v920
      %vm922 = vweird.f32 %v675
      %vm923 = vweird.f32 %v917
      %vm924 = vmor %vm922, %vm923
      %v925 = vsel %vm924, %v917, %v921
      %v926 = vand.u32 2147483647, %v675
      %vm927 = vcmp.eq.f32.partialorder %v926, 8.507059e+37
      %v928 = vand.u32 %v675, 2147483648
      %v929 = vor.u32 1.1754944e-38, %v928
      %v930 = vsel %vm927, %v929, %v925
      %v931 = vmul.f32 1.0, %v930
      %v932 = vrcp.pop %v676
      %v933 = vmul.f32 %v676, %v932
      %v934 = vsub.f32 1.0, %v933
      %v935 = vmul.f32 %v932, %v934
      %v936 = vadd.f32 %v932, %v935
      %vm937 = vweird.f32 %v676
      %vm938 = vweird.f32 %v932
      %vm939 = vmor %vm937, %vm938
      %v940 = vsel %vm939, %v932, %v936
      %v941 = vand.u32 2147483647, %v676
      %vm942 = vcmp.eq.f32.partialorder %v941, 8.507059e+37
      %v943 = vand.u32 %v676, 2147483648
      %v944 = vor.u32 1.1754944e-38, %v943
      %v945 = vsel %vm942, %v944, %v940
      %v946 = vmul.f32 1.0, %v945
      %v947 = vrcp.pop %v677
      %v948 = vmul.f32 %v677, %v947
      %v949 = vsub.f32 1.0, %v948
      %v950 = vmul.f32 %v947, %v949
      %v951 = vadd.f32 %v947, %v950
      %vm952 = vweird.f32 %v677
      %vm953 = vweird.f32 %v947
      %vm954 = vmor %vm952, %vm953
      %v955 = vsel %vm954, %v947, %v951
      %v956 = vand.u32 2147483647, %v677
      %vm957 = vcmp.eq.f32.partialorder %v956, 8.507059e+37
      %v958 = vand.u32 %v677, 2147483648
      %v959 = vor.u32 1.1754944e-38, %v958
      %v960 = vsel %vm957, %v959, %v955
      %v961 = vmul.f32 1.0, %v960
      %v962 = vrcp.pop %v678
      %v963 = vmul.f32 %v678, %v962
      %v964 = vsub.f32 1.0, %v963
      %v965 = vmul.f32 %v962, %v964
      %v966 = vadd.f32 %v962, %v965
      %vm967 = vweird.f32 %v678
      %vm968 = vweird.f32 %v962
      %vm969 = vmor %vm967, %vm968
      %v970 = vsel %vm969, %v962, %v966
      %v971 = vand.u32 2147483647, %v678
      %vm972 = vcmp.eq.f32.partialorder %v971, 8.507059e+37
      %v973 = vand.u32 %v678, 2147483648
      %v974 = vor.u32 1.1754944e-38, %v973
      %v975 = vsel %vm972, %v974, %v970
      %v976 = vmul.f32 1.0, %v975
      %v977 = vrcp.pop %v679
      %v978 = vmul.f32 %v679, %v977
      %v979 = vsub.f32 1.0, %v978
      %v980 = vmul.f32 %v977, %v979
      %v981 = vadd.f32 %v977, %v980
      %vm982 = vweird.f32 %v679
      %vm983 = vweird.f32 %v977
      %vm984 = vmor %vm982, %vm983
      %v985 = vsel %vm984, %v977, %v981
      %v986 = vand.u32 2147483647, %v679
      %vm987 = vcmp.eq.f32.partialorder %v986, 8.507059e+37
      %v988 = vand.u32 %v679, 2147483648
      %v989 = vor.u32 1.1754944e-38, %v988
      %v990 = vsel %vm987, %v989, %v985
      %v991 = vmul.f32 1.0, %v990
      %v992 = vrcp.pop %v680
      %v993 = vmul.f32 %v680, %v992
      %v994 = vsub.f32 1.0, %v993
      %v995 = vmul.f32 %v992, %v994
      %v996 = vadd.f32 %v992, %v995
      %vm997 = vweird.f32 %v680
      %vm998 = vweird.f32 %v992
      %vm999 = vmor %vm997, %vm998
      %v1000 = vsel %vm999, %v992, %v996
      %v1001 = vand.u32 2147483647, %v680
      %vm1002 = vcmp.eq.f32.partialorder %v1001, 8.507059e+37
      %v1003 = vand.u32 %v680, 2147483648
      %v1004 = vor.u32 1.1754944e-38, %v1003
      %v1005 = vsel %vm1002, %v1004, %v1000
      %v1006 = vmul.f32 1.0, %v1005
      %v1007 = vrcp.pop %v681
      %v1008 = vmul.f32 %v681, %v1007
      %v1009 = vsub.f32 1.0, %v1008
      %v1010 = vmul.f32 %v1007, %v1009
      %v1011 = vadd.f32 %v1007, %v1010
      %vm1012 = vweird.f32 %v681
      %vm1013 = vweird.f32 %v1007
      %vm1014 = vmor %vm1012, %vm1013
      %v1015 = vsel %vm1014, %v1007, %v1011
      %v1016 = vand.u32 2147483647, %v681
      %vm1017 = vcmp.eq.f32.partialorder %v1016, 8.507059e+37
      %v1018 = vand.u32 %v681, 2147483648
      %v1019 = vor.u32 1.1754944e-38, %v1018
      %v1020 = vsel %vm1017, %v1019, %v1015
      %v1021 = vmul.f32 1.0, %v1020
      %v1022 = vrcp.pop %v682
      %v1023 = vmul.f32 %v682, %v1022
      %v1024 = vsub.f32 1.0, %v1023
      %v1025 = vmul.f32 %v1022, %v1024
      %v1026 = vadd.f32 %v1022, %v1025
      %vm1027 = vweird.f32 %v682
      %vm1028 = vweird.f32 %v1022
      %vm1029 = vmor %vm1027, %vm1028
      %v1030 = vsel %vm1029, %v1022, %v1026
      %v1031 = vand.u32 2147483647, %v682
      %vm1032 = vcmp.eq.f32.partialorder %v1031, 8.507059e+37
      %v1033 = vand.u32 %v682, 2147483648
      %v1034 = vor.u32 1.1754944e-38, %v1033
      %v1035 = vsel %vm1032, %v1034, %v1030
      %v1036 = vmul.f32 1.0, %v1035
      %v1037 = vrcp.pop %v683
      %v1038 = vmul.f32 %v683, %v1037
      %v1039 = vsub.f32 1.0, %v1038
      %v1040 = vmul.f32 %v1037, %v1039
      %v1041 = vadd.f32 %v1037, %v1040
      %vm1042 = vweird.f32 %v683
      %vm1043 = vweird.f32 %v1037
      %vm1044 = vmor %vm1042, %vm1043
      %v1045 = vsel %vm1044, %v1037, %v1041
      %v1046 = vand.u32 2147483647, %v683
      %vm1047 = vcmp.eq.f32.partialorder %v1046, 8.507059e+37
      %v1048 = vand.u32 %v683, 2147483648
      %v1049 = vor.u32 1.1754944e-38, %v1048
      %v1050 = vsel %vm1047, %v1049, %v1045
      %v1051 = vmul.f32 1.0, %v1050
      %v1052 = vrcp.pop %v684
      %v1053 = vmul.f32 %v684, %v1052
      %v1054 = vsub.f32 1.0, %v1053
      %v1055 = vmul.f32 %v1052, %v1054
      %v1056 = vadd.f32 %v1052, %v1055
      %vm1057 = vweird.f32 %v684
      %vm1058 = vweird.f32 %v1052
      %vm1059 = vmor %vm1057, %vm1058
      %v1060 = vsel %vm1059, %v1052, %v1056
      %v1061 = vand.u32 2147483647, %v684
      %vm1062 = vcmp.eq.f32.partialorder %v1061, 8.507059e+37
      %v1063 = vand.u32 %v684, 2147483648
      %v1064 = vor.u32 1.1754944e-38, %v1063
      %v1065 = vsel %vm1062, %v1064, %v1060
      %v1066 = vmul.f32 1.0, %v1065
      %v1067 = vrcp.pop %v685
      %v1068 = vmul.f32 %v685, %v1067
      %v1069 = vsub.f32 1.0, %v1068
      %v1070 = vmul.f32 %v1067, %v1069
      %v1071 = vadd.f32 %v1067, %v1070
      %vm1072 = vweird.f32 %v685
      %vm1073 = vweird.f32 %v1067
      %vm1074 = vmor %vm1072, %vm1073
      %v1075 = vsel %vm1074, %v1067, %v1071
      %v1076 = vand.u32 2147483647, %v685
      %vm1077 = vcmp.eq.f32.partialorder %v1076, 8.507059e+37
      %v1078 = vand.u32 %v685, 2147483648
      %v1079 = vor.u32 1.1754944e-38, %v1078
      %v1080 = vsel %vm1077, %v1079, %v1075
      %v1081 = vmul.f32 1.0, %v1080
      %v1082 = vrcp.pop %v686
      %v1083 = vmul.f32 %v686, %v1082
      %v1084 = vsub.f32 1.0, %v1083
      %v1085 = vmul.f32 %v1082, %v1084
      %v1086 = vadd.f32 %v1082, %v1085
      %vm1087 = vweird.f32 %v686
      %vm1088 = vweird.f32 %v1082
      %vm1089 = vmor %vm1087, %vm1088
      %v1090 = vsel %vm1089, %v1082, %v1086
      %v1091 = vand.u32 2147483647, %v686
      %vm1092 = vcmp.eq.f32.partialorder %v1091, 8.507059e+37
      %v1093 = vand.u32 %v686, 2147483648
      %v1094 = vor.u32 1.1754944e-38, %v1093
      %v1095 = vsel %vm1092, %v1094, %v1090
      %v1096 = vmul.f32 1.0, %v1095
      %v1097 = vrcp.pop %v687
      %v1098 = vmul.f32 %v687, %v1097
      %v1099 = vsub.f32 1.0, %v1098
      %v1100 = vmul.f32 %v1097, %v1099
      %v1101 = vadd.f32 %v1097, %v1100
      %vm1102 = vweird.f32 %v687
      %vm1103 = vweird.f32 %v1097
      %vm1104 = vmor %vm1102, %vm1103
      %v1105 = vsel %vm1104, %v1097, %v1101
      %v1106 = vand.u32 2147483647, %v687
      %vm1107 = vcmp.eq.f32.partialorder %v1106, 8.507059e+37
      %v1108 = vand.u32 %v687, 2147483648
      %v1109 = vor.u32 1.1754944e-38, %v1108
      %v1110 = vsel %vm1107, %v1109, %v1105
      %v1111 = vmul.f32 1.0, %v1110
      %v1112 = vrcp.pop %v688
      %v1113 = vmul.f32 %v688, %v1112
      %v1114 = vsub.f32 1.0, %v1113
      %v1115 = vmul.f32 %v1112, %v1114
      %v1116 = vadd.f32 %v1112, %v1115
      %vm1117 = vweird.f32 %v688
      %vm1118 = vweird.f32 %v1112
      %vm1119 = vmor %vm1117, %vm1118
      %v1120 = vsel %vm1119, %v1112, %v1116
      %v1121 = vand.u32 2147483647, %v688
      %vm1122 = vcmp.eq.f32.partialorder %v1121, 8.507059e+37
      %v1123 = vand.u32 %v688, 2147483648
      %v1124 = vor.u32 1.1754944e-38, %v1123
      %v1125 = vsel %vm1122, %v1124, %v1120
      %v1126 = vmul.f32 1.0, %v1125
      %v1127 = vrcp.pop %v689
      %v1128 = vmul.f32 %v689, %v1127
      %v1129 = vsub.f32 1.0, %v1128
      %v1130 = vmul.f32 %v1127, %v1129
      %v1131 = vadd.f32 %v1127, %v1130
      %vm1132 = vweird.f32 %v689
      %vm1133 = vweird.f32 %v1127
      %vm1134 = vmor %vm1132, %vm1133
      %v1135 = vsel %vm1134, %v1127, %v1131
      %v1136 = vand.u32 2147483647, %v689
      %vm1137 = vcmp.eq.f32.partialorder %v1136, 8.507059e+37
      %v1138 = vand.u32 %v689, 2147483648
      %v1139 = vor.u32 1.1754944e-38, %v1138
      %v1140 = vsel %vm1137, %v1139, %v1135
      %v1141 = vmul.f32 1.0, %v1140
      %v1142 = vrcp.pop %v690
      %v1143 = vmul.f32 %v690, %v1142
      %v1144 = vsub.f32 1.0, %v1143
      %v1145 = vmul.f32 %v1142, %v1144
      %v1146 = vadd.f32 %v1142, %v1145
      %vm1147 = vweird.f32 %v690
      %vm1148 = vweird.f32 %v1142
      %vm1149 = vmor %vm1147, %vm1148
      %v1150 = vsel %vm1149, %v1142, %v1146
      %v1151 = vand.u32 2147483647, %v690
      %vm1152 = vcmp.eq.f32.partialorder %v1151, 8.507059e+37
      %v1153 = vand.u32 %v690, 2147483648
      %v1154 = vor.u32 1.1754944e-38, %v1153
      %v1155 = vsel %vm1152, %v1154, %v1150
      %v1156 = vmul.f32 1.0, %v1155
      %v1157 = vrcp.pop %v691
      %v1158 = vmul.f32 %v691, %v1157
      %v1159 = vsub.f32 1.0, %v1158
      %v1160 = vmul.f32 %v1157, %v1159
      %v1161 = vadd.f32 %v1157, %v1160
      %vm1162 = vweird.f32 %v691
      %vm1163 = vweird.f32 %v1157
      %vm1164 = vmor %vm1162, %vm1163
      %v1165 = vsel %vm1164, %v1157, %v1161
      %v1166 = vand.u32 2147483647, %v691
      %vm1167 = vcmp.eq.f32.partialorder %v1166, 8.507059e+37
      %v1168 = vand.u32 %v691, 2147483648
      %v1169 = vor.u32 1.1754944e-38, %v1168
      %v1170 = vsel %vm1167, %v1169, %v1165
      %v1171 = vmul.f32 1.0, %v1170
      %v1172 = vmul.f32 %v485, %v706
      %v1173 = vmul.f32 %v487, %v721
      %v1174 = vmul.f32 %v490, %v736
      %v1175 = vmul.f32 %v492, %v751
      %v1176 = vmul.f32 %v495, %v766
      %v1177 = vmul.f32 %v497, %v781
      %v1178 = vmul.f32 %v500, %v796
      %v1179 = vmul.f32 %v502, %v811
      %v1180 = vmul.f32 %v505, %v826
      %v1181 = vmul.f32 %v507, %v841
      %v1182 = vmul.f32 %v510, %v856
      %v1183 = vmul.f32 %v512, %v871
      %v1184 = vmul.f32 %v515, %v886
      %v1185 = vmul.f32 %v517, %v901
      %v1186 = vmul.f32 %v520, %v916
      %v1187 = vmul.f32 %v522, %v931
      %v1188 = vmul.f32 %v525, %v946
      %v1189 = vmul.f32 %v527, %v961
      %v1190 = vmul.f32 %v530, %v976
      %v1191 = vmul.f32 %v532, %v991
      %v1192 = vmul.f32 %v535, %v1006
      %v1193 = vmul.f32 %v537, %v1021
      %v1194 = vmul.f32 %v540, %v1036
      %v1195 = vmul.f32 %v542, %v1051
      %v1196 = vmul.f32 %v545, %v1066
      %v1197 = vmul.f32 %v547, %v1081
      %v1198 = vmul.f32 %v550, %v1096
      %v1199 = vmul.f32 %v552, %v1111
      %v1200 = vmul.f32 %v555, %v1126
      %v1201 = vmul.f32 %v557, %v1141
      %v1202 = vmul.f32 %v560, %v1156
      %v1203 = vmul.f32 %v562, %v1171
      %v1204 = vpack.c.bf16 %v1173, %v1172
      %v1205 = vpack.c.bf16 %v1175, %v1174
      %v1206 = vpack.c.bf16 %v1177, %v1176
      %v1207 = vpack.c.bf16 %v1179, %v1178
      %v1208 = vpack.c.bf16 %v1181, %v1180
      %v1209 = vpack.c.bf16 %v1183, %v1182
      %v1210 = vpack.c.bf16 %v1185, %v1184
      %v1211 = vpack.c.bf16 %v1187, %v1186
      %v1212 = vpack.c.bf16 %v1189, %v1188
      %v1213 = vpack.c.bf16 %v1191, %v1190
      %v1214 = vpack.c.bf16 %v1193, %v1192
      %v1215 = vpack.c.bf16 %v1195, %v1194
      %v1216 = vpack.c.bf16 %v1197, %v1196
      %v1217 = vpack.c.bf16 %v1199, %v1198
      %v1218 = vpack.c.bf16 %v1201, %v1200
      %v1219 = vpack.c.bf16 %v1203, %v1202
      %v1220 = vld [vmem:[%s4] sm:$0xf]
      %v1221 = vld [vmem:[%s296] sm:$0xf]
      %v1222 = vld [vmem:[%s296 + $0x4] sm:$0xf]
      %v1223 = vld [vmem:[%s296 + $0x8] sm:$0xf]
      %v1224 = vld [vmem:[%s296 + $0xc] sm:$0xf]
      %v1225 = vld [vmem:[%s296 + $0x10] sm:$0xf]
      %v1226 = vld [vmem:[%s296 + $0x14] sm:$0xf]
      %v1227 = vld [vmem:[%s296 + $0x18] sm:$0xf]
      %v1228 = vld [vmem:[%s296 + $0x1c] sm:$0xf]
      %v1229 = vld [vmem:[%s296 + $0x20] sm:$0xf]
      %v1230 = vld [vmem:[%s296 + $0x24] sm:$0xf]
      %v1231 = vld [vmem:[%s296 + $0x28] sm:$0xf]
      %v1232 = vld [vmem:[%s296 + $0x2c] sm:$0xf]
      %v1233 = vld [vmem:[%s296 + $0x30] sm:$0xf]
      %v1234 = vld [vmem:[%s296 + $0x34] sm:$0xf]
      %v1235 = vld [vmem:[%s296 + $0x38] sm:$0xf]
      %v1236 = vld [vmem:[%s296 + $0x3c] sm:$0xf]
      %v1237 = vld [vmem:[%s296 + $0x40] sm:$0xf]
      %v1238 = vld [vmem:[%s296 + $0x44] sm:$0xf]
      %v1239 = vld [vmem:[%s296 + $0x48] sm:$0xf]
      %v1240 = vld [vmem:[%s296 + $0x4c] sm:$0xf]
      %v1241 = vld [vmem:[%s296 + $0x50] sm:$0xf]
      %v1242 = vld [vmem:[%s296 + $0x54] sm:$0xf]
      %v1243 = vld [vmem:[%s296 + $0x58] sm:$0xf]
      %v1244 = vld [vmem:[%s296 + $0x5c] sm:$0xf]
      %v1245 = vld [vmem:[%s296 + $0x60] sm:$0xf]
      %v1246 = vld [vmem:[%s296 + $0x64] sm:$0xf]
      %v1247 = vld [vmem:[%s296 + $0x68] sm:$0xf]
      %v1248 = vld [vmem:[%s296 + $0x6c] sm:$0xf]
      %v1249 = vld [vmem:[%s296 + $0x70] sm:$0xf]
      %v1250 = vld [vmem:[%s296 + $0x74] sm:$0xf]
      %v1251 = vld [vmem:[%s296 + $0x78] sm:$0xf]
      %v1252 = vld [vmem:[%s296 + $0x7c] sm:$0xf]
      %v1253 = vld [vmem:[%s5] sm:$0x7]
      %v1286 = vunpack.c.l.b16 %v1221
      %v1287 = vunpack.c.l.b16 %v1222
      %v1288 = vunpack.c.l.b16 %v1223
      %v1289 = vunpack.c.l.b16 %v1224
      %v1290 = vunpack.c.l.b16 %v1225
      %v1291 = vunpack.c.l.b16 %v1226
      %v1292 = vunpack.c.l.b16 %v1227
      %v1293 = vunpack.c.l.b16 %v1228
      %v1294 = vunpack.c.l.b16 %v1229
      %v1295 = vunpack.c.l.b16 %v1230
      %v1296 = vunpack.c.l.b16 %v1231
      %v1297 = vunpack.c.l.b16 %v1232
      %v1298 = vunpack.c.l.b16 %v1233
      %v1299 = vunpack.c.l.b16 %v1234
      %v1300 = vunpack.c.l.b16 %v1235
      %v1301 = vunpack.c.l.b16 %v1236
      %v1302 = vunpack.c.l.b16 %v1237
      %v1303 = vunpack.c.l.b16 %v1238
      %v1304 = vunpack.c.l.b16 %v1239
      %v1305 = vunpack.c.l.b16 %v1240
      %v1306 = vunpack.c.l.b16 %v1241
      %v1307 = vunpack.c.l.b16 %v1242
      %v1308 = vunpack.c.l.b16 %v1243
      %v1309 = vunpack.c.l.b16 %v1244
      %v1310 = vunpack.c.l.b16 %v1245
      %v1311 = vunpack.c.l.b16 %v1246
      %v1312 = vunpack.c.l.b16 %v1247
      %v1313 = vunpack.c.l.b16 %v1248
      %v1314 = vunpack.c.l.b16 %v1249
      %v1315 = vunpack.c.l.b16 %v1250
      %v1316 = vunpack.c.l.b16 %v1251
      %v1317 = vunpack.c.l.b16 %v1252
      %v1318 = vpack.c.b16 %v1287, %v1286
      %v1319 = vpack.c.b16 %v1289, %v1288
      %v1320 = vpack.c.b16 %v1291, %v1290
      %v1321 = vpack.c.b16 %v1293, %v1292
      %v1322 = vpack.c.b16 %v1295, %v1294
      %v1323 = vpack.c.b16 %v1297, %v1296
      %v1324 = vpack.c.b16 %v1299, %v1298
      %v1325 = vpack.c.b16 %v1301, %v1300
      %v1326 = vpack.c.b16 %v1303, %v1302
      %v1327 = vpack.c.b16 %v1305, %v1304
      %v1328 = vpack.c.b16 %v1307, %v1306
      %v1329 = vpack.c.b16 %v1309, %v1308
      %v1330 = vpack.c.b16 %v1311, %v1310
      %v1331 = vpack.c.b16 %v1313, %v1312
      %v1332 = vpack.c.b16 %v1315, %v1314
      %v1333 = vpack.c.b16 %v1317, %v1316
      %vm1334 = vcmask 48128
      %v1336 = vsel %vm1334, %v1318, 0
      %v1339 = vsel %vm1334, %v1319, 0
      %v1342 = vsel %vm1334, %v1320, 0
      %v1345 = vsel %vm1334, %v1321, 0
      %v1348 = vsel %vm1334, %v1322, 0
      %v1351 = vsel %vm1334, %v1323, 0
      %v1354 = vsel %vm1334, %v1324, 0
      %v1357 = vsel %vm1334, %v1325, 0
      %v1360 = vsel %vm1334, %v1326, 0
      %v1363 = vsel %vm1334, %v1327, 0
      %v1366 = vsel %vm1334, %v1328, 0
      %v1369 = vsel %vm1334, %v1329, 0
      %v1372 = vsel %vm1334, %v1330, 0
      %v1375 = vsel %vm1334, %v1331, 0
      %v1378 = vsel %vm1334, %v1332, 0
      %v1381 = vsel %vm1334, %v1333, 0
      %vm1383 = vcmask 1042432
      %v1385 = vsel %vm1383, %v1253, 0
      %1387 = vmatpush.bf16.msra.mxu0 0
      %1388 = vmatpush.bf16.msra.mxu0 0
      %1389 = vmatpush.bf16.msra.mxu0 0
      %1390 = vmatpush.bf16.msra.mxu0 0
      %1391 = vmatpush.bf16.msra.mxu0 0
      %1392 = vmatpush.bf16.msra.mxu0 0
      %1393 = vmatpush.bf16.msra.mxu0 0
      %1394 = vmatpush.bf16.msra.mxu0 %v1385
      %1395 = vmatmul.bf16.gmra.mxu0 %v1336
      %v1396 = vpop.f32.mrf.mxu0
      %v1397 = vadd.f32 0.0, %v1396
      %v1398 = vpop.f32.mrf.mxu0
      %v1399 = vadd.f32 0.0, %v1398
      %1400 = vmatmul.bf16.gmra.mxu0 %v1339
      %v1401 = vpop.f32.mrf.mxu0
      %v1402 = vadd.f32 0.0, %v1401
      %v1403 = vpop.f32.mrf.mxu0
      %v1404 = vadd.f32 0.0, %v1403
      %1405 = vmatmul.bf16.gmra.mxu0 %v1342
      %v1406 = vpop.f32.mrf.mxu0
      %v1407 = vadd.f32 0.0, %v1406
      %v1408 = vpop.f32.mrf.mxu0
      %v1409 = vadd.f32 0.0, %v1408
      %1410 = vmatmul.bf16.gmra.mxu0 %v1345
      %v1411 = vpop.f32.mrf.mxu0
      %v1412 = vadd.f32 0.0, %v1411
      %v1413 = vpop.f32.mrf.mxu0
      %v1414 = vadd.f32 0.0, %v1413
      %1415 = vmatmul.bf16.gmra.mxu0 %v1348
      %v1416 = vpop.f32.mrf.mxu0
      %v1417 = vadd.f32 0.0, %v1416
      %v1418 = vpop.f32.mrf.mxu0
      %v1419 = vadd.f32 0.0, %v1418
      %1420 = vmatmul.bf16.gmra.mxu0 %v1351
      %v1421 = vpop.f32.mrf.mxu0
      %v1422 = vadd.f32 0.0, %v1421
      %v1423 = vpop.f32.mrf.mxu0
      %v1424 = vadd.f32 0.0, %v1423
      %1425 = vmatmul.bf16.gmra.mxu0 %v1354
      %v1426 = vpop.f32.mrf.mxu0
      %v1427 = vadd.f32 0.0, %v1426
      %v1428 = vpop.f32.mrf.mxu0
      %v1429 = vadd.f32 0.0, %v1428
      %1430 = vmatmul.bf16.gmra.mxu0 %v1357
      %v1431 = vpop.f32.mrf.mxu0
      %v1432 = vadd.f32 0.0, %v1431
      %v1433 = vpop.f32.mrf.mxu0
      %v1434 = vadd.f32 0.0, %v1433
      %1435 = vmatmul.bf16.gmra.mxu0 %v1360
      %v1436 = vpop.f32.mrf.mxu0
      %v1437 = vadd.f32 0.0, %v1436
      %v1438 = vpop.f32.mrf.mxu0
      %v1439 = vadd.f32 0.0, %v1438
      %1440 = vmatmul.bf16.gmra.mxu0 %v1363
      %v1441 = vpop.f32.mrf.mxu0
      %v1442 = vadd.f32 0.0, %v1441
      %v1443 = vpop.f32.mrf.mxu0
      %v1444 = vadd.f32 0.0, %v1443
      %1445 = vmatmul.bf16.gmra.mxu0 %v1366
      %v1446 = vpop.f32.mrf.mxu0
      %v1447 = vadd.f32 0.0, %v1446
      %v1448 = vpop.f32.mrf.mxu0
      %v1449 = vadd.f32 0.0, %v1448
      %1450 = vmatmul.bf16.gmra.mxu0 %v1369
      %v1451 = vpop.f32.mrf.mxu0
      %v1452 = vadd.f32 0.0, %v1451
      %v1453 = vpop.f32.mrf.mxu0
      %v1454 = vadd.f32 0.0, %v1453
      %1455 = vmatmul.bf16.gmra.mxu0 %v1372
      %v1456 = vpop.f32.mrf.mxu0
      %v1457 = vadd.f32 0.0, %v1456
      %v1458 = vpop.f32.mrf.mxu0
      %v1459 = vadd.f32 0.0, %v1458
      %1460 = vmatmul.bf16.gmra.mxu0 %v1375
      %v1461 = vpop.f32.mrf.mxu0
      %v1462 = vadd.f32 0.0, %v1461
      %v1463 = vpop.f32.mrf.mxu0
      %v1464 = vadd.f32 0.0, %v1463
      %1465 = vmatmul.bf16.gmra.mxu0 %v1378
      %v1466 = vpop.f32.mrf.mxu0
      %v1467 = vadd.f32 0.0, %v1466
      %v1468 = vpop.f32.mrf.mxu0
      %v1469 = vadd.f32 0.0, %v1468
      %1470 = vmatmul.bf16.gmra.mxu0 %v1381
      %v1471 = vpop.f32.mrf.mxu0
      %v1472 = vadd.f32 0.0, %v1471
      %v1473 = vpop.f32.mrf.mxu0
      %v1474 = vadd.f32 0.0, %v1473
      %1475 = vdwg.mxu0
      %vm1476 = vcmask 64512
      %v1478 = vsel %vm1476, %v1204, 0
      %v1481 = vsel %vm1476, %v1205, 0
      %v1484 = vsel %vm1476, %v1206, 0
      %v1487 = vsel %vm1476, %v1207, 0
      %v1490 = vsel %vm1476, %v1208, 0
      %v1493 = vsel %vm1476, %v1209, 0
      %v1496 = vsel %vm1476, %v1210, 0
      %v1499 = vsel %vm1476, %v1211, 0
      %v1502 = vsel %vm1476, %v1212, 0
      %v1505 = vsel %vm1476, %v1213, 0
      %v1508 = vsel %vm1476, %v1214, 0
      %v1511 = vsel %vm1476, %v1215, 0
      %v1514 = vsel %vm1476, %v1216, 0
      %v1517 = vsel %vm1476, %v1217, 0
      %v1520 = vsel %vm1476, %v1218, 0
      %v1523 = vsel %vm1476, %v1219, 0
      %vm1525 = vcmask 1043456
      %v1527 = vsel %vm1525, %v1220, 0
      %1529 = vmatpush.bf16.msra.mxu0 0
      %1530 = vmatpush.bf16.msra.mxu0 0
      %1531 = vmatpush.bf16.msra.mxu0 0
      %1532 = vmatpush.bf16.msra.mxu0 0
      %1533 = vmatpush.bf16.msra.mxu0 0
      %1534 = vmatpush.bf16.msra.mxu0 0
      %1535 = vmatpush.bf16.msra.mxu0 0
      %1536 = vmatpush.bf16.msra.mxu0 %v1527
      %1537 = vmatmul.bf16.gmra.mxu0 %v1478
      %v1538 = vpop.f32.mrf.mxu0
      %v1539 = vadd.f32 %v1397, %v1538
      %v1540 = vpop.f32.mrf.mxu0
      %v1541 = vadd.f32 %v1399, %v1540
      %1542 = vmatmul.bf16.gmra.mxu0 %v1481
      %v1543 = vpop.f32.mrf.mxu0
      %v1544 = vadd.f32 %v1402, %v1543
      %v1545 = vpop.f32.mrf.mxu0
      %v1546 = vadd.f32 %v1404, %v1545
      %1547 = vmatmul.bf16.gmra.mxu0 %v1484
      %v1548 = vpop.f32.mrf.mxu0
      %v1549 = vadd.f32 %v1407, %v1548
      %v1550 = vpop.f32.mrf.mxu0
      %v1551 = vadd.f32 %v1409, %v1550
      %1552 = vmatmul.bf16.gmra.mxu0 %v1487
      %v1553 = vpop.f32.mrf.mxu0
      %v1554 = vadd.f32 %v1412, %v1553
      %v1555 = vpop.f32.mrf.mxu0
      %v1556 = vadd.f32 %v1414, %v1555
      %1557 = vmatmul.bf16.gmra.mxu0 %v1490
      %v1558 = vpop.f32.mrf.mxu0
      %v1559 = vadd.f32 %v1417, %v1558
      %v1560 = vpop.f32.mrf.mxu0
      %v1561 = vadd.f32 %v1419, %v1560
      %1562 = vmatmul.bf16.gmra.mxu0 %v1493
      %v1563 = vpop.f32.mrf.mxu0
      %v1564 = vadd.f32 %v1422, %v1563
      %v1565 = vpop.f32.mrf.mxu0
      %v1566 = vadd.f32 %v1424, %v1565
      %1567 = vmatmul.bf16.gmra.mxu0 %v1496
      %v1568 = vpop.f32.mrf.mxu0
      %v1569 = vadd.f32 %v1427, %v1568
      %v1570 = vpop.f32.mrf.mxu0
      %v1571 = vadd.f32 %v1429, %v1570
      %1572 = vmatmul.bf16.gmra.mxu0 %v1499
      %v1573 = vpop.f32.mrf.mxu0
      %v1574 = vadd.f32 %v1432, %v1573
      %v1575 = vpop.f32.mrf.mxu0
      %v1576 = vadd.f32 %v1434, %v1575
      %1577 = vmatmul.bf16.gmra.mxu0 %v1502
      %v1578 = vpop.f32.mrf.mxu0
      %v1579 = vadd.f32 %v1437, %v1578
      %v1580 = vpop.f32.mrf.mxu0
      %v1581 = vadd.f32 %v1439, %v1580
      %1582 = vmatmul.bf16.gmra.mxu0 %v1505
      %v1583 = vpop.f32.mrf.mxu0
      %v1584 = vadd.f32 %v1442, %v1583
      %v1585 = vpop.f32.mrf.mxu0
      %v1586 = vadd.f32 %v1444, %v1585
      %1587 = vmatmul.bf16.gmra.mxu0 %v1508
      %v1588 = vpop.f32.mrf.mxu0
      %v1589 = vadd.f32 %v1447, %v1588
      %v1590 = vpop.f32.mrf.mxu0
      %v1591 = vadd.f32 %v1449, %v1590
      %1592 = vmatmul.bf16.gmra.mxu0 %v1511
      %v1593 = vpop.f32.mrf.mxu0
      %v1594 = vadd.f32 %v1452, %v1593
      %v1595 = vpop.f32.mrf.mxu0
      %v1596 = vadd.f32 %v1454, %v1595
      %1597 = vmatmul.bf16.gmra.mxu0 %v1514
      %v1598 = vpop.f32.mrf.mxu0
      %v1599 = vadd.f32 %v1457, %v1598
      %v1600 = vpop.f32.mrf.mxu0
      %v1601 = vadd.f32 %v1459, %v1600
      %1602 = vmatmul.bf16.gmra.mxu0 %v1517
      %v1603 = vpop.f32.mrf.mxu0
      %v1604 = vadd.f32 %v1462, %v1603
      %v1605 = vpop.f32.mrf.mxu0
      %v1606 = vadd.f32 %v1464, %v1605
      %1607 = vmatmul.bf16.gmra.mxu0 %v1520
      %v1608 = vpop.f32.mrf.mxu0
      %v1609 = vadd.f32 %v1467, %v1608
      %v1610 = vpop.f32.mrf.mxu0
      %v1611 = vadd.f32 %v1469, %v1610
      %1612 = vmatmul.bf16.gmra.mxu0 %v1523
      %v1613 = vpop.f32.mrf.mxu0
      %v1614 = vadd.f32 %v1472, %v1613
      %v1615 = vpop.f32.mrf.mxu0
      %v1616 = vadd.f32 %v1474, %v1615
      %1617 = vdwg.mxu0
      %v1618 = vld [vmem:[%s6] sm:$0x1]
      %v1620 = vperm.slane %v1618, 0
      %v1622 = vadd.f32 %v1539, %v1620
      %v1623 = vadd.f32 %v1541, %v1620
      %v1624 = vadd.f32 %v1544, %v1620
      %v1625 = vadd.f32 %v1546, %v1620
      %v1626 = vadd.f32 %v1549, %v1620
      %v1627 = vadd.f32 %v1551, %v1620
      %v1628 = vadd.f32 %v1554, %v1620
      %v1629 = vadd.f32 %v1556, %v1620
      %v1630 = vadd.f32 %v1559, %v1620
      %v1631 = vadd.f32 %v1561, %v1620
      %v1632 = vadd.f32 %v1564, %v1620
      %v1633 = vadd.f32 %v1566, %v1620
      %v1634 = vadd.f32 %v1569, %v1620
      %v1635 = vadd.f32 %v1571, %v1620
      %v1636 = vadd.f32 %v1574, %v1620
      %v1637 = vadd.f32 %v1576, %v1620
      %v1638 = vadd.f32 %v1579, %v1620
      %v1639 = vadd.f32 %v1581, %v1620
      %v1640 = vadd.f32 %v1584, %v1620
      %v1641 = vadd.f32 %v1586, %v1620
      %v1642 = vadd.f32 %v1589, %v1620
      %v1643 = vadd.f32 %v1591, %v1620
      %v1644 = vadd.f32 %v1594, %v1620
      %v1645 = vadd.f32 %v1596, %v1620
      %v1646 = vadd.f32 %v1599, %v1620
      %v1647 = vadd.f32 %v1601, %v1620
      %v1648 = vadd.f32 %v1604, %v1620
      %v1649 = vadd.f32 %v1606, %v1620
      %v1650 = vadd.f32 %v1609, %v1620
      %v1651 = vadd.f32 %v1611, %v1620
      %v1652 = vadd.f32 %v1614, %v1620
      %v1653 = vadd.f32 %v1616, %v1620
      %v1654 = vxor.u32 %v1622, 2147483648
      %v1655 = vxor.u32 %v1623, 2147483648
      %v1656 = vxor.u32 %v1624, 2147483648
      %v1657 = vxor.u32 %v1625, 2147483648
      %v1658 = vxor.u32 %v1626, 2147483648
      %v1659 = vxor.u32 %v1627, 2147483648
      %v1660 = vxor.u32 %v1628, 2147483648
      %v1661 = vxor.u32 %v1629, 2147483648
      %v1662 = vxor.u32 %v1630, 2147483648
      %v1663 = vxor.u32 %v1631, 2147483648
      %v1664 = vxor.u32 %v1632, 2147483648
      %v1665 = vxor.u32 %v1633, 2147483648
      %v1666 = vxor.u32 %v1634, 2147483648
      %v1667 = vxor.u32 %v1635, 2147483648
      %v1668 = vxor.u32 %v1636, 2147483648
      %v1669 = vxor.u32 %v1637, 2147483648
      %v1670 = vxor.u32 %v1638, 2147483648
      %v1671 = vxor.u32 %v1639, 2147483648
      %v1672 = vxor.u32 %v1640, 2147483648
      %v1673 = vxor.u32 %v1641, 2147483648
      %v1674 = vxor.u32 %v1642, 2147483648
      %v1675 = vxor.u32 %v1643, 2147483648
      %v1676 = vxor.u32 %v1644, 2147483648
      %v1677 = vxor.u32 %v1645, 2147483648
      %v1678 = vxor.u32 %v1646, 2147483648
      %v1679 = vxor.u32 %v1647, 2147483648
      %v1680 = vxor.u32 %v1648, 2147483648
      %v1681 = vxor.u32 %v1649, 2147483648
      %v1682 = vxor.u32 %v1650, 2147483648
      %v1683 = vxor.u32 %v1651, 2147483648
      %v1684 = vxor.u32 %v1652, 2147483648
      %v1685 = vxor.u32 %v1653, 2147483648
      %v1686 = vmul.f32 %v1654, 1.442695
      %v1687 = vpow.pop %v1686
      %v1688 = vmul.f32 %v1655, 1.442695
      %v1689 = vpow.pop %v1688
      %v1690 = vmul.f32 %v1656, 1.442695
      %v1691 = vpow.pop %v1690
      %v1692 = vmul.f32 %v1657, 1.442695
      %v1693 = vpow.pop %v1692
      %v1694 = vmul.f32 %v1658, 1.442695
      %v1695 = vpow.pop %v1694
      %v1696 = vmul.f32 %v1659, 1.442695
      %v1697 = vpow.pop %v1696
      %v1698 = vmul.f32 %v1660, 1.442695
      %v1699 = vpow.pop %v1698
      %v1700 = vmul.f32 %v1661, 1.442695
      %v1701 = vpow.pop %v1700
      %v1702 = vmul.f32 %v1662, 1.442695
      %v1703 = vpow.pop %v1702
      %v1704 = vmul.f32 %v1663, 1.442695
      %v1705 = vpow.pop %v1704
      %v1706 = vmul.f32 %v1664, 1.442695
      %v1707 = vpow.pop %v1706
      %v1708 = vmul.f32 %v1665, 1.442695
      %v1709 = vpow.pop %v1708
      %v1710 = vmul.f32 %v1666, 1.442695
      %v1711 = vpow.pop %v1710
      %v1712 = vmul.f32 %v1667, 1.442695
      %v1713 = vpow.pop %v1712
      %v1714 = vmul.f32 %v1668, 1.442695
      %v1715 = vpow.pop %v1714
      %v1716 = vmul.f32 %v1669, 1.442695
      %v1717 = vpow.pop %v1716
      %v1718 = vmul.f32 %v1670, 1.442695
      %v1719 = vpow.pop %v1718
      %v1720 = vmul.f32 %v1671, 1.442695
      %v1721 = vpow.pop %v1720
      %v1722 = vmul.f32 %v1672, 1.442695
      %v1723 = vpow.pop %v1722
      %v1724 = vmul.f32 %v1673, 1.442695
      %v1725 = vpow.pop %v1724
      %v1726 = vmul.f32 %v1674, 1.442695
      %v1727 = vpow.pop %v1726
      %v1728 = vmul.f32 %v1675, 1.442695
      %v1729 = vpow.pop %v1728
      %v1730 = vmul.f32 %v1676, 1.442695
      %v1731 = vpow.pop %v1730
      %v1732 = vmul.f32 %v1677, 1.442695
      %v1733 = vpow.pop %v1732
      %v1734 = vmul.f32 %v1678, 1.442695
      %v1735 = vpow.pop %v1734
      %v1736 = vmul.f32 %v1679, 1.442695
      %v1737 = vpow.pop %v1736
      %v1738 = vmul.f32 %v1680, 1.442695
      %v1739 = vpow.pop %v1738
      %v1740 = vmul.f32 %v1681, 1.442695
      %v1741 = vpow.pop %v1740
      %v1742 = vmul.f32 %v1682, 1.442695
      %v1743 = vpow.pop %v1742
      %v1744 = vmul.f32 %v1683, 1.442695
      %v1745 = vpow.pop %v1744
      %v1746 = vmul.f32 %v1684, 1.442695
      %v1747 = vpow.pop %v1746
      %v1748 = vmul.f32 %v1685, 1.442695
      %v1749 = vpow.pop %v1748
      %v1750 = vadd.f32 %v1687, 1.0
      %v1751 = vadd.f32 %v1689, 1.0
      %v1752 = vadd.f32 %v1691, 1.0
      %v1753 = vadd.f32 %v1693, 1.0
      %v1754 = vadd.f32 %v1695, 1.0
      %v1755 = vadd.f32 %v1697, 1.0
      %v1756 = vadd.f32 %v1699, 1.0
      %v1757 = vadd.f32 %v1701, 1.0
      %v1758 = vadd.f32 %v1703, 1.0
      %v1759 = vadd.f32 %v1705, 1.0
      %v1760 = vadd.f32 %v1707, 1.0
      %v1761 = vadd.f32 %v1709, 1.0
      %v1762 = vadd.f32 %v1711, 1.0
      %v1763 = vadd.f32 %v1713, 1.0
      %v1764 = vadd.f32 %v1715, 1.0
      %v1765 = vadd.f32 %v1717, 1.0
      %v1766 = vadd.f32 %v1719, 1.0
      %v1767 = vadd.f32 %v1721, 1.0
      %v1768 = vadd.f32 %v1723, 1.0
      %v1769 = vadd.f32 %v1725, 1.0
      %v1770 = vadd.f32 %v1727, 1.0
      %v1771 = vadd.f32 %v1729, 1.0
      %v1772 = vadd.f32 %v1731, 1.0
      %v1773 = vadd.f32 %v1733, 1.0
      %v1774 = vadd.f32 %v1735, 1.0
      %v1775 = vadd.f32 %v1737, 1.0
      %v1776 = vadd.f32 %v1739, 1.0
      %v1777 = vadd.f32 %v1741, 1.0
      %v1778 = vadd.f32 %v1743, 1.0
      %v1779 = vadd.f32 %v1745, 1.0
      %v1780 = vadd.f32 %v1747, 1.0
      %v1781 = vadd.f32 %v1749, 1.0
      %v1782 = vrcp.pop %v1750
      %v1783 = vmul.f32 %v1750, %v1782
      %v1784 = vsub.f32 1.0, %v1783
      %v1785 = vmul.f32 %v1782, %v1784
      %v1786 = vadd.f32 %v1782, %v1785
      %vm1787 = vweird.f32 %v1750
      %vm1788 = vweird.f32 %v1782
      %vm1789 = vmor %vm1787, %vm1788
      %v1790 = vsel %vm1789, %v1782, %v1786
      %v1791 = vand.u32 2147483647, %v1750
      %vm1792 = vcmp.eq.f32.partialorder %v1791, 8.507059e+37
      %v1793 = vand.u32 %v1750, 2147483648
      %v1794 = vor.u32 1.1754944e-38, %v1793
      %v1795 = vsel %vm1792, %v1794, %v1790
      %v1796 = vmul.f32 1.0, %v1795
      %v1797 = vrcp.pop %v1751
      %v1798 = vmul.f32 %v1751, %v1797
      %v1799 = vsub.f32 1.0, %v1798
      %v1800 = vmul.f32 %v1797, %v1799
      %v1801 = vadd.f32 %v1797, %v1800
      %vm1802 = vweird.f32 %v1751
      %vm1803 = vweird.f32 %v1797
      %vm1804 = vmor %vm1802, %vm1803
      %v1805 = vsel %vm1804, %v1797, %v1801
      %v1806 = vand.u32 2147483647, %v1751
      %vm1807 = vcmp.eq.f32.partialorder %v1806, 8.507059e+37
      %v1808 = vand.u32 %v1751, 2147483648
      %v1809 = vor.u32 1.1754944e-38, %v1808
      %v1810 = vsel %vm1807, %v1809, %v1805
      %v1811 = vmul.f32 1.0, %v1810
      %v1812 = vrcp.pop %v1752
      %v1813 = vmul.f32 %v1752, %v1812
      %v1814 = vsub.f32 1.0, %v1813
      %v1815 = vmul.f32 %v1812, %v1814
      %v1816 = vadd.f32 %v1812, %v1815
      %vm1817 = vweird.f32 %v1752
      %vm1818 = vweird.f32 %v1812
      %vm1819 = vmor %vm1817, %vm1818
      %v1820 = vsel %vm1819, %v1812, %v1816
      %v1821 = vand.u32 2147483647, %v1752
      %vm1822 = vcmp.eq.f32.partialorder %v1821, 8.507059e+37
      %v1823 = vand.u32 %v1752, 2147483648
      %v1824 = vor.u32 1.1754944e-38, %v1823
      %v1825 = vsel %vm1822, %v1824, %v1820
      %v1826 = vmul.f32 1.0, %v1825
      %v1827 = vrcp.pop %v1753
      %v1828 = vmul.f32 %v1753, %v1827
      %v1829 = vsub.f32 1.0, %v1828
      %v1830 = vmul.f32 %v1827, %v1829
      %v1831 = vadd.f32 %v1827, %v1830
      %vm1832 = vweird.f32 %v1753
      %vm1833 = vweird.f32 %v1827
      %vm1834 = vmor %vm1832, %vm1833
      %v1835 = vsel %vm1834, %v1827, %v1831
      %v1836 = vand.u32 2147483647, %v1753
      %vm1837 = vcmp.eq.f32.partialorder %v1836, 8.507059e+37
      %v1838 = vand.u32 %v1753, 2147483648
      %v1839 = vor.u32 1.1754944e-38, %v1838
      %v1840 = vsel %vm1837, %v1839, %v1835
      %v1841 = vmul.f32 1.0, %v1840
      %v1842 = vrcp.pop %v1754
      %v1843 = vmul.f32 %v1754, %v1842
      %v1844 = vsub.f32 1.0, %v1843
      %v1845 = vmul.f32 %v1842, %v1844
      %v1846 = vadd.f32 %v1842, %v1845
      %vm1847 = vweird.f32 %v1754
      %vm1848 = vweird.f32 %v1842
      %vm1849 = vmor %vm1847, %vm1848
      %v1850 = vsel %vm1849, %v1842, %v1846
      %v1851 = vand.u32 2147483647, %v1754
      %vm1852 = vcmp.eq.f32.partialorder %v1851, 8.507059e+37
      %v1853 = vand.u32 %v1754, 2147483648
      %v1854 = vor.u32 1.1754944e-38, %v1853
      %v1855 = vsel %vm1852, %v1854, %v1850
      %v1856 = vmul.f32 1.0, %v1855
      %v1857 = vrcp.pop %v1755
      %v1858 = vmul.f32 %v1755, %v1857
      %v1859 = vsub.f32 1.0, %v1858
      %v1860 = vmul.f32 %v1857, %v1859
      %v1861 = vadd.f32 %v1857, %v1860
      %vm1862 = vweird.f32 %v1755
      %vm1863 = vweird.f32 %v1857
      %vm1864 = vmor %vm1862, %vm1863
      %v1865 = vsel %vm1864, %v1857, %v1861
      %v1866 = vand.u32 2147483647, %v1755
      %vm1867 = vcmp.eq.f32.partialorder %v1866, 8.507059e+37
      %v1868 = vand.u32 %v1755, 2147483648
      %v1869 = vor.u32 1.1754944e-38, %v1868
      %v1870 = vsel %vm1867, %v1869, %v1865
      %v1871 = vmul.f32 1.0, %v1870
      %v1872 = vrcp.pop %v1756
      %v1873 = vmul.f32 %v1756, %v1872
      %v1874 = vsub.f32 1.0, %v1873
      %v1875 = vmul.f32 %v1872, %v1874
      %v1876 = vadd.f32 %v1872, %v1875
      %vm1877 = vweird.f32 %v1756
      %vm1878 = vweird.f32 %v1872
      %vm1879 = vmor %vm1877, %vm1878
      %v1880 = vsel %vm1879, %v1872, %v1876
      %v1881 = vand.u32 2147483647, %v1756
      %vm1882 = vcmp.eq.f32.partialorder %v1881, 8.507059e+37
      %v1883 = vand.u32 %v1756, 2147483648
      %v1884 = vor.u32 1.1754944e-38, %v1883
      %v1885 = vsel %vm1882, %v1884, %v1880
      %v1886 = vmul.f32 1.0, %v1885
      %v1887 = vrcp.pop %v1757
      %v1888 = vmul.f32 %v1757, %v1887
      %v1889 = vsub.f32 1.0, %v1888
      %v1890 = vmul.f32 %v1887, %v1889
      %v1891 = vadd.f32 %v1887, %v1890
      %vm1892 = vweird.f32 %v1757
      %vm1893 = vweird.f32 %v1887
      %vm1894 = vmor %vm1892, %vm1893
      %v1895 = vsel %vm1894, %v1887, %v1891
      %v1896 = vand.u32 2147483647, %v1757
      %vm1897 = vcmp.eq.f32.partialorder %v1896, 8.507059e+37
      %v1898 = vand.u32 %v1757, 2147483648
      %v1899 = vor.u32 1.1754944e-38, %v1898
      %v1900 = vsel %vm1897, %v1899, %v1895
      %v1901 = vmul.f32 1.0, %v1900
      %v1902 = vrcp.pop %v1758
      %v1903 = vmul.f32 %v1758, %v1902
      %v1904 = vsub.f32 1.0, %v1903
      %v1905 = vmul.f32 %v1902, %v1904
      %v1906 = vadd.f32 %v1902, %v1905
      %vm1907 = vweird.f32 %v1758
      %vm1908 = vweird.f32 %v1902
      %vm1909 = vmor %vm1907, %vm1908
      %v1910 = vsel %vm1909, %v1902, %v1906
      %v1911 = vand.u32 2147483647, %v1758
      %vm1912 = vcmp.eq.f32.partialorder %v1911, 8.507059e+37
      %v1913 = vand.u32 %v1758, 2147483648
      %v1914 = vor.u32 1.1754944e-38, %v1913
      %v1915 = vsel %vm1912, %v1914, %v1910
      %v1916 = vmul.f32 1.0, %v1915
      %v1917 = vrcp.pop %v1759
      %v1918 = vmul.f32 %v1759, %v1917
      %v1919 = vsub.f32 1.0, %v1918
      %v1920 = vmul.f32 %v1917, %v1919
      %v1921 = vadd.f32 %v1917, %v1920
      %vm1922 = vweird.f32 %v1759
      %vm1923 = vweird.f32 %v1917
      %vm1924 = vmor %vm1922, %vm1923
      %v1925 = vsel %vm1924, %v1917, %v1921
      %v1926 = vand.u32 2147483647, %v1759
      %vm1927 = vcmp.eq.f32.partialorder %v1926, 8.507059e+37
      %v1928 = vand.u32 %v1759, 2147483648
      %v1929 = vor.u32 1.1754944e-38, %v1928
      %v1930 = vsel %vm1927, %v1929, %v1925
      %v1931 = vmul.f32 1.0, %v1930
      %v1932 = vrcp.pop %v1760
      %v1933 = vmul.f32 %v1760, %v1932
      %v1934 = vsub.f32 1.0, %v1933
      %v1935 = vmul.f32 %v1932, %v1934
      %v1936 = vadd.f32 %v1932, %v1935
      %vm1937 = vweird.f32 %v1760
      %vm1938 = vweird.f32 %v1932
      %vm1939 = vmor %vm1937, %vm1938
      %v1940 = vsel %vm1939, %v1932, %v1936
      %v1941 = vand.u32 2147483647, %v1760
      %vm1942 = vcmp.eq.f32.partialorder %v1941, 8.507059e+37
      %v1943 = vand.u32 %v1760, 2147483648
      %v1944 = vor.u32 1.1754944e-38, %v1943
      %v1945 = vsel %vm1942, %v1944, %v1940
      %v1946 = vmul.f32 1.0, %v1945
      %v1947 = vrcp.pop %v1761
      %v1948 = vmul.f32 %v1761, %v1947
      %v1949 = vsub.f32 1.0, %v1948
      %v1950 = vmul.f32 %v1947, %v1949
      %v1951 = vadd.f32 %v1947, %v1950
      %vm1952 = vweird.f32 %v1761
      %vm1953 = vweird.f32 %v1947
      %vm1954 = vmor %vm1952, %vm1953
      %v1955 = vsel %vm1954, %v1947, %v1951
      %v1956 = vand.u32 2147483647, %v1761
      %vm1957 = vcmp.eq.f32.partialorder %v1956, 8.507059e+37
      %v1958 = vand.u32 %v1761, 2147483648
      %v1959 = vor.u32 1.1754944e-38, %v1958
      %v1960 = vsel %vm1957, %v1959, %v1955
      %v1961 = vmul.f32 1.0, %v1960
      %v1962 = vrcp.pop %v1762
      %v1963 = vmul.f32 %v1762, %v1962
      %v1964 = vsub.f32 1.0, %v1963
      %v1965 = vmul.f32 %v1962, %v1964
      %v1966 = vadd.f32 %v1962, %v1965
      %vm1967 = vweird.f32 %v1762
      %vm1968 = vweird.f32 %v1962
      %vm1969 = vmor %vm1967, %vm1968
      %v1970 = vsel %vm1969, %v1962, %v1966
      %v1971 = vand.u32 2147483647, %v1762
      %vm1972 = vcmp.eq.f32.partialorder %v1971, 8.507059e+37
      %v1973 = vand.u32 %v1762, 2147483648
      %v1974 = vor.u32 1.1754944e-38, %v1973
      %v1975 = vsel %vm1972, %v1974, %v1970
      %v1976 = vmul.f32 1.0, %v1975
      %v1977 = vrcp.pop %v1763
      %v1978 = vmul.f32 %v1763, %v1977
      %v1979 = vsub.f32 1.0, %v1978
      %v1980 = vmul.f32 %v1977, %v1979
      %v1981 = vadd.f32 %v1977, %v1980
      %vm1982 = vweird.f32 %v1763
      %vm1983 = vweird.f32 %v1977
      %vm1984 = vmor %vm1982, %vm1983
      %v1985 = vsel %vm1984, %v1977, %v1981
      %v1986 = vand.u32 2147483647, %v1763
      %vm1987 = vcmp.eq.f32.partialorder %v1986, 8.507059e+37
      %v1988 = vand.u32 %v1763, 2147483648
      %v1989 = vor.u32 1.1754944e-38, %v1988
      %v1990 = vsel %vm1987, %v1989, %v1985
      %v1991 = vmul.f32 1.0, %v1990
      %v1992 = vrcp.pop %v1764
      %v1993 = vmul.f32 %v1764, %v1992
      %v1994 = vsub.f32 1.0, %v1993
      %v1995 = vmul.f32 %v1992, %v1994
      %v1996 = vadd.f32 %v1992, %v1995
      %vm1997 = vweird.f32 %v1764
      %vm1998 = vweird.f32 %v1992
      %vm1999 = vmor %vm1997, %vm1998
      %v2000 = vsel %vm1999, %v1992, %v1996
      %v2001 = vand.u32 2147483647, %v1764
      %vm2002 = vcmp.eq.f32.partialorder %v2001, 8.507059e+37
      %v2003 = vand.u32 %v1764, 2147483648
      %v2004 = vor.u32 1.1754944e-38, %v2003
      %v2005 = vsel %vm2002, %v2004, %v2000
      %v2006 = vmul.f32 1.0, %v2005
      %v2007 = vrcp.pop %v1765
      %v2008 = vmul.f32 %v1765, %v2007
      %v2009 = vsub.f32 1.0, %v2008
      %v2010 = vmul.f32 %v2007, %v2009
      %v2011 = vadd.f32 %v2007, %v2010
      %vm2012 = vweird.f32 %v1765
      %vm2013 = vweird.f32 %v2007
      %vm2014 = vmor %vm2012, %vm2013
      %v2015 = vsel %vm2014, %v2007, %v2011
      %v2016 = vand.u32 2147483647, %v1765
      %vm2017 = vcmp.eq.f32.partialorder %v2016, 8.507059e+37
      %v2018 = vand.u32 %v1765, 2147483648
      %v2019 = vor.u32 1.1754944e-38, %v2018
      %v2020 = vsel %vm2017, %v2019, %v2015
      %v2021 = vmul.f32 1.0, %v2020
      %v2022 = vrcp.pop %v1766
      %v2023 = vmul.f32 %v1766, %v2022
      %v2024 = vsub.f32 1.0, %v2023
      %v2025 = vmul.f32 %v2022, %v2024
      %v2026 = vadd.f32 %v2022, %v2025
      %vm2027 = vweird.f32 %v1766
      %vm2028 = vweird.f32 %v2022
      %vm2029 = vmor %vm2027, %vm2028
      %v2030 = vsel %vm2029, %v2022, %v2026
      %v2031 = vand.u32 2147483647, %v1766
      %vm2032 = vcmp.eq.f32.partialorder %v2031, 8.507059e+37
      %v2033 = vand.u32 %v1766, 2147483648
      %v2034 = vor.u32 1.1754944e-38, %v2033
      %v2035 = vsel %vm2032, %v2034, %v2030
      %v2036 = vmul.f32 1.0, %v2035
      %v2037 = vrcp.pop %v1767
      %v2038 = vmul.f32 %v1767, %v2037
      %v2039 = vsub.f32 1.0, %v2038
      %v2040 = vmul.f32 %v2037, %v2039
      %v2041 = vadd.f32 %v2037, %v2040
      %vm2042 = vweird.f32 %v1767
      %vm2043 = vweird.f32 %v2037
      %vm2044 = vmor %vm2042, %vm2043
      %v2045 = vsel %vm2044, %v2037, %v2041
      %v2046 = vand.u32 2147483647, %v1767
      %vm2047 = vcmp.eq.f32.partialorder %v2046, 8.507059e+37
      %v2048 = vand.u32 %v1767, 2147483648
      %v2049 = vor.u32 1.1754944e-38, %v2048
      %v2050 = vsel %vm2047, %v2049, %v2045
      %v2051 = vmul.f32 1.0, %v2050
      %v2052 = vrcp.pop %v1768
      %v2053 = vmul.f32 %v1768, %v2052
      %v2054 = vsub.f32 1.0, %v2053
      %v2055 = vmul.f32 %v2052, %v2054
      %v2056 = vadd.f32 %v2052, %v2055
      %vm2057 = vweird.f32 %v1768
      %vm2058 = vweird.f32 %v2052
      %vm2059 = vmor %vm2057, %vm2058
      %v2060 = vsel %vm2059, %v2052, %v2056
      %v2061 = vand.u32 2147483647, %v1768
      %vm2062 = vcmp.eq.f32.partialorder %v2061, 8.507059e+37
      %v2063 = vand.u32 %v1768, 2147483648
      %v2064 = vor.u32 1.1754944e-38, %v2063
      %v2065 = vsel %vm2062, %v2064, %v2060
      %v2066 = vmul.f32 1.0, %v2065
      %v2067 = vrcp.pop %v1769
      %v2068 = vmul.f32 %v1769, %v2067
      %v2069 = vsub.f32 1.0, %v2068
      %v2070 = vmul.f32 %v2067, %v2069
      %v2071 = vadd.f32 %v2067, %v2070
      %vm2072 = vweird.f32 %v1769
      %vm2073 = vweird.f32 %v2067
      %vm2074 = vmor %vm2072, %vm2073
      %v2075 = vsel %vm2074, %v2067, %v2071
      %v2076 = vand.u32 2147483647, %v1769
      %vm2077 = vcmp.eq.f32.partialorder %v2076, 8.507059e+37
      %v2078 = vand.u32 %v1769, 2147483648
      %v2079 = vor.u32 1.1754944e-38, %v2078
      %v2080 = vsel %vm2077, %v2079, %v2075
      %v2081 = vmul.f32 1.0, %v2080
      %v2082 = vrcp.pop %v1770
      %v2083 = vmul.f32 %v1770, %v2082
      %v2084 = vsub.f32 1.0, %v2083
      %v2085 = vmul.f32 %v2082, %v2084
      %v2086 = vadd.f32 %v2082, %v2085
      %vm2087 = vweird.f32 %v1770
      %vm2088 = vweird.f32 %v2082
      %vm2089 = vmor %vm2087, %vm2088
      %v2090 = vsel %vm2089, %v2082, %v2086
      %v2091 = vand.u32 2147483647, %v1770
      %vm2092 = vcmp.eq.f32.partialorder %v2091, 8.507059e+37
      %v2093 = vand.u32 %v1770, 2147483648
      %v2094 = vor.u32 1.1754944e-38, %v2093
      %v2095 = vsel %vm2092, %v2094, %v2090
      %v2096 = vmul.f32 1.0, %v2095
      %v2097 = vrcp.pop %v1771
      %v2098 = vmul.f32 %v1771, %v2097
      %v2099 = vsub.f32 1.0, %v2098
      %v2100 = vmul.f32 %v2097, %v2099
      %v2101 = vadd.f32 %v2097, %v2100
      %vm2102 = vweird.f32 %v1771
      %vm2103 = vweird.f32 %v2097
      %vm2104 = vmor %vm2102, %vm2103
      %v2105 = vsel %vm2104, %v2097, %v2101
      %v2106 = vand.u32 2147483647, %v1771
      %vm2107 = vcmp.eq.f32.partialorder %v2106, 8.507059e+37
      %v2108 = vand.u32 %v1771, 2147483648
      %v2109 = vor.u32 1.1754944e-38, %v2108
      %v2110 = vsel %vm2107, %v2109, %v2105
      %v2111 = vmul.f32 1.0, %v2110
      %v2112 = vrcp.pop %v1772
      %v2113 = vmul.f32 %v1772, %v2112
      %v2114 = vsub.f32 1.0, %v2113
      %v2115 = vmul.f32 %v2112, %v2114
      %v2116 = vadd.f32 %v2112, %v2115
      %vm2117 = vweird.f32 %v1772
      %vm2118 = vweird.f32 %v2112
      %vm2119 = vmor %vm2117, %vm2118
      %v2120 = vsel %vm2119, %v2112, %v2116
      %v2121 = vand.u32 2147483647, %v1772
      %vm2122 = vcmp.eq.f32.partialorder %v2121, 8.507059e+37
      %v2123 = vand.u32 %v1772, 2147483648
      %v2124 = vor.u32 1.1754944e-38, %v2123
      %v2125 = vsel %vm2122, %v2124, %v2120
      %v2126 = vmul.f32 1.0, %v2125
      %v2127 = vrcp.pop %v1773
      %v2128 = vmul.f32 %v1773, %v2127
      %v2129 = vsub.f32 1.0, %v2128
      %v2130 = vmul.f32 %v2127, %v2129
      %v2131 = vadd.f32 %v2127, %v2130
      %vm2132 = vweird.f32 %v1773
      %vm2133 = vweird.f32 %v2127
      %vm2134 = vmor %vm2132, %vm2133
      %v2135 = vsel %vm2134, %v2127, %v2131
      %v2136 = vand.u32 2147483647, %v1773
      %vm2137 = vcmp.eq.f32.partialorder %v2136, 8.507059e+37
      %v2138 = vand.u32 %v1773, 2147483648
      %v2139 = vor.u32 1.1754944e-38, %v2138
      %v2140 = vsel %vm2137, %v2139, %v2135
      %v2141 = vmul.f32 1.0, %v2140
      %v2142 = vrcp.pop %v1774
      %v2143 = vmul.f32 %v1774, %v2142
      %v2144 = vsub.f32 1.0, %v2143
      %v2145 = vmul.f32 %v2142, %v2144
      %v2146 = vadd.f32 %v2142, %v2145
      %vm2147 = vweird.f32 %v1774
      %vm2148 = vweird.f32 %v2142
      %vm2149 = vmor %vm2147, %vm2148
      %v2150 = vsel %vm2149, %v2142, %v2146
      %v2151 = vand.u32 2147483647, %v1774
      %vm2152 = vcmp.eq.f32.partialorder %v2151, 8.507059e+37
      %v2153 = vand.u32 %v1774, 2147483648
      %v2154 = vor.u32 1.1754944e-38, %v2153
      %v2155 = vsel %vm2152, %v2154, %v2150
      %v2156 = vmul.f32 1.0, %v2155
      %v2157 = vrcp.pop %v1775
      %v2158 = vmul.f32 %v1775, %v2157
      %v2159 = vsub.f32 1.0, %v2158
      %v2160 = vmul.f32 %v2157, %v2159
      %v2161 = vadd.f32 %v2157, %v2160
      %vm2162 = vweird.f32 %v1775
      %vm2163 = vweird.f32 %v2157
      %vm2164 = vmor %vm2162, %vm2163
      %v2165 = vsel %vm2164, %v2157, %v2161
      %v2166 = vand.u32 2147483647, %v1775
      %vm2167 = vcmp.eq.f32.partialorder %v2166, 8.507059e+37
      %v2168 = vand.u32 %v1775, 2147483648
      %v2169 = vor.u32 1.1754944e-38, %v2168
      %v2170 = vsel %vm2167, %v2169, %v2165
      %v2171 = vmul.f32 1.0, %v2170
      %v2172 = vrcp.pop %v1776
      %v2173 = vmul.f32 %v1776, %v2172
      %v2174 = vsub.f32 1.0, %v2173
      %v2175 = vmul.f32 %v2172, %v2174
      %v2176 = vadd.f32 %v2172, %v2175
      %vm2177 = vweird.f32 %v1776
      %vm2178 = vweird.f32 %v2172
      %vm2179 = vmor %vm2177, %vm2178
      %v2180 = vsel %vm2179, %v2172, %v2176
      %v2181 = vand.u32 2147483647, %v1776
      %vm2182 = vcmp.eq.f32.partialorder %v2181, 8.507059e+37
      %v2183 = vand.u32 %v1776, 2147483648
      %v2184 = vor.u32 1.1754944e-38, %v2183
      %v2185 = vsel %vm2182, %v2184, %v2180
      %v2186 = vmul.f32 1.0, %v2185
      %v2187 = vrcp.pop %v1777
      %v2188 = vmul.f32 %v1777, %v2187
      %v2189 = vsub.f32 1.0, %v2188
      %v2190 = vmul.f32 %v2187, %v2189
      %v2191 = vadd.f32 %v2187, %v2190
      %vm2192 = vweird.f32 %v1777
      %vm2193 = vweird.f32 %v2187
      %vm2194 = vmor %vm2192, %vm2193
      %v2195 = vsel %vm2194, %v2187, %v2191
      %v2196 = vand.u32 2147483647, %v1777
      %vm2197 = vcmp.eq.f32.partialorder %v2196, 8.507059e+37
      %v2198 = vand.u32 %v1777, 2147483648
      %v2199 = vor.u32 1.1754944e-38, %v2198
      %v2200 = vsel %vm2197, %v2199, %v2195
      %v2201 = vmul.f32 1.0, %v2200
      %v2202 = vrcp.pop %v1778
      %v2203 = vmul.f32 %v1778, %v2202
      %v2204 = vsub.f32 1.0, %v2203
      %v2205 = vmul.f32 %v2202, %v2204
      %v2206 = vadd.f32 %v2202, %v2205
      %vm2207 = vweird.f32 %v1778
      %vm2208 = vweird.f32 %v2202
      %vm2209 = vmor %vm2207, %vm2208
      %v2210 = vsel %vm2209, %v2202, %v2206
      %v2211 = vand.u32 2147483647, %v1778
      %vm2212 = vcmp.eq.f32.partialorder %v2211, 8.507059e+37
      %v2213 = vand.u32 %v1778, 2147483648
      %v2214 = vor.u32 1.1754944e-38, %v2213
      %v2215 = vsel %vm2212, %v2214, %v2210
      %v2216 = vmul.f32 1.0, %v2215
      %v2217 = vrcp.pop %v1779
      %v2218 = vmul.f32 %v1779, %v2217
      %v2219 = vsub.f32 1.0, %v2218
      %v2220 = vmul.f32 %v2217, %v2219
      %v2221 = vadd.f32 %v2217, %v2220
      %vm2222 = vweird.f32 %v1779
      %vm2223 = vweird.f32 %v2217
      %vm2224 = vmor %vm2222, %vm2223
      %v2225 = vsel %vm2224, %v2217, %v2221
      %v2226 = vand.u32 2147483647, %v1779
      %vm2227 = vcmp.eq.f32.partialorder %v2226, 8.507059e+37
      %v2228 = vand.u32 %v1779, 2147483648
      %v2229 = vor.u32 1.1754944e-38, %v2228
      %v2230 = vsel %vm2227, %v2229, %v2225
      %v2231 = vmul.f32 1.0, %v2230
      %v2232 = vrcp.pop %v1780
      %v2233 = vmul.f32 %v1780, %v2232
      %v2234 = vsub.f32 1.0, %v2233
      %v2235 = vmul.f32 %v2232, %v2234
      %v2236 = vadd.f32 %v2232, %v2235
      %vm2237 = vweird.f32 %v1780
      %vm2238 = vweird.f32 %v2232
      %vm2239 = vmor %vm2237, %vm2238
      %v2240 = vsel %vm2239, %v2232, %v2236
      %v2241 = vand.u32 2147483647, %v1780
      %vm2242 = vcmp.eq.f32.partialorder %v2241, 8.507059e+37
      %v2243 = vand.u32 %v1780, 2147483648
      %v2244 = vor.u32 1.1754944e-38, %v2243
      %v2245 = vsel %vm2242, %v2244, %v2240
      %v2246 = vmul.f32 1.0, %v2245
      %v2247 = vrcp.pop %v1781
      %v2248 = vmul.f32 %v1781, %v2247
      %v2249 = vsub.f32 1.0, %v2248
      %v2250 = vmul.f32 %v2247, %v2249
      %v2251 = vadd.f32 %v2247, %v2250
      %vm2252 = vweird.f32 %v1781
      %vm2253 = vweird.f32 %v2247
      %vm2254 = vmor %vm2252, %vm2253
      %v2255 = vsel %vm2254, %v2247, %v2251
      %v2256 = vand.u32 2147483647, %v1781
      %vm2257 = vcmp.eq.f32.partialorder %v2256, 8.507059e+37
      %v2258 = vand.u32 %v1781, 2147483648
      %v2259 = vor.u32 1.1754944e-38, %v2258
      %v2260 = vsel %vm2257, %v2259, %v2255
      %v2261 = vmul.f32 1.0, %v2260
      %v2262 = vmul.f32 %v1622, %v1796
      %v2263 = vmul.f32 %v1623, %v1811
      %v2264 = vmul.f32 %v1624, %v1826
      %v2265 = vmul.f32 %v1625, %v1841
      %v2266 = vmul.f32 %v1626, %v1856
      %v2267 = vmul.f32 %v1627, %v1871
      %v2268 = vmul.f32 %v1628, %v1886
      %v2269 = vmul.f32 %v1629, %v1901
      %v2270 = vmul.f32 %v1630, %v1916
      %v2271 = vmul.f32 %v1631, %v1931
      %v2272 = vmul.f32 %v1632, %v1946
      %v2273 = vmul.f32 %v1633, %v1961
      %v2274 = vmul.f32 %v1634, %v1976
      %v2275 = vmul.f32 %v1635, %v1991
      %v2276 = vmul.f32 %v1636, %v2006
      %v2277 = vmul.f32 %v1637, %v2021
      %v2278 = vmul.f32 %v1638, %v2036
      %v2279 = vmul.f32 %v1639, %v2051
      %v2280 = vmul.f32 %v1640, %v2066
      %v2281 = vmul.f32 %v1641, %v2081
      %v2282 = vmul.f32 %v1642, %v2096
      %v2283 = vmul.f32 %v1643, %v2111
      %v2284 = vmul.f32 %v1644, %v2126
      %v2285 = vmul.f32 %v1645, %v2141
      %v2286 = vmul.f32 %v1646, %v2156
      %v2287 = vmul.f32 %v1647, %v2171
      %v2288 = vmul.f32 %v1648, %v2186
      %v2289 = vmul.f32 %v1649, %v2201
      %v2290 = vmul.f32 %v1650, %v2216
      %v2291 = vmul.f32 %v1651, %v2231
      %v2292 = vmul.f32 %v1652, %v2246
      %v2293 = vmul.f32 %v1653, %v2261
      %v2294 = vpack.c.bf16 %v2262, %v2262
      %v2295 = vpack.c.bf16 %v2263, %v2263
      %v2296 = vpack.c.bf16 %v2264, %v2264
      %v2297 = vpack.c.bf16 %v2265, %v2265
      %v2298 = vpack.c.bf16 %v2266, %v2266
      %v2299 = vpack.c.bf16 %v2267, %v2267
      %v2300 = vpack.c.bf16 %v2268, %v2268
      %v2301 = vpack.c.bf16 %v2269, %v2269
      %v2302 = vpack.c.bf16 %v2270, %v2270
      %v2303 = vpack.c.bf16 %v2271, %v2271
      %v2304 = vpack.c.bf16 %v2272, %v2272
      %v2305 = vpack.c.bf16 %v2273, %v2273
      %v2306 = vpack.c.bf16 %v2274, %v2274
      %v2307 = vpack.c.bf16 %v2275, %v2275
      %v2308 = vpack.c.bf16 %v2276, %v2276
      %v2309 = vpack.c.bf16 %v2277, %v2277
      %v2310 = vpack.c.bf16 %v2278, %v2278
      %v2311 = vpack.c.bf16 %v2279, %v2279
      %v2312 = vpack.c.bf16 %v2280, %v2280
      %v2313 = vpack.c.bf16 %v2281, %v2281
      %v2314 = vpack.c.bf16 %v2282, %v2282
      %v2315 = vpack.c.bf16 %v2283, %v2283
      %v2316 = vpack.c.bf16 %v2284, %v2284
      %v2317 = vpack.c.bf16 %v2285, %v2285
      %v2318 = vpack.c.bf16 %v2286, %v2286
      %v2319 = vpack.c.bf16 %v2287, %v2287
      %v2320 = vpack.c.bf16 %v2288, %v2288
      %v2321 = vpack.c.bf16 %v2289, %v2289
      %v2322 = vpack.c.bf16 %v2290, %v2290
      %v2323 = vpack.c.bf16 %v2291, %v2291
      %v2324 = vpack.c.bf16 %v2292, %v2292
      %v2325 = vpack.c.bf16 %v2293, %v2293
      %vm2326 = vcmask 60416
      %2327 = vst.msk [vmem:[%s302] sm:$0xf] %vm2326, %v2294
      %2328 = vst.msk [vmem:[%s302 + $0x4] sm:$0xf] %vm2326, %v2295
      %2329 = vst.msk [vmem:[%s302 + $0x8] sm:$0xf] %vm2326, %v2296
      %2330 = vst.msk [vmem:[%s302 + $0xc] sm:$0xf] %vm2326, %v2297
      %2331 = vst.msk [vmem:[%s302 + $0x10] sm:$0xf] %vm2326, %v2298
      %2332 = vst.msk [vmem:[%s302 + $0x14] sm:$0xf] %vm2326, %v2299
      %2333 = vst.msk [vmem:[%s302 + $0x18] sm:$0xf] %vm2326, %v2300
      %2334 = vst.msk [vmem:[%s302 + $0x1c] sm:$0xf] %vm2326, %v2301
      %2335 = vst.msk [vmem:[%s302 + $0x20] sm:$0xf] %vm2326, %v2302
      %2336 = vst.msk [vmem:[%s302 + $0x24] sm:$0xf] %vm2326, %v2303
      %2337 = vst.msk [vmem:[%s302 + $0x28] sm:$0xf] %vm2326, %v2304
      %2338 = vst.msk [vmem:[%s302 + $0x2c] sm:$0xf] %vm2326, %v2305
      %2339 = vst.msk [vmem:[%s302 + $0x30] sm:$0xf] %vm2326, %v2306
      %2340 = vst.msk [vmem:[%s302 + $0x34] sm:$0xf] %vm2326, %v2307
      %2341 = vst.msk [vmem:[%s302 + $0x38] sm:$0xf] %vm2326, %v2308
      %2342 = vst.msk [vmem:[%s302 + $0x3c] sm:$0xf] %vm2326, %v2309
      %2343 = vst.msk [vmem:[%s302 + $0x40] sm:$0xf] %vm2326, %v2310
      %2344 = vst.msk [vmem:[%s302 + $0x44] sm:$0xf] %vm2326, %v2311
      %2345 = vst.msk [vmem:[%s302 + $0x48] sm:$0xf] %vm2326, %v2312
      %2346 = vst.msk [vmem:[%s302 + $0x4c] sm:$0xf] %vm2326, %v2313
      %2347 = vst.msk [vmem:[%s302 + $0x50] sm:$0xf] %vm2326, %v2314
      %2348 = vst.msk [vmem:[%s302 + $0x54] sm:$0xf] %vm2326, %v2315
      %2349 = vst.msk [vmem:[%s302 + $0x58] sm:$0xf] %vm2326, %v2316
      %2350 = vst.msk [vmem:[%s302 + $0x5c] sm:$0xf] %vm2326, %v2317
      %2351 = vst.msk [vmem:[%s302 + $0x60] sm:$0xf] %vm2326, %v2318
      %2352 = vst.msk [vmem:[%s302 + $0x64] sm:$0xf] %vm2326, %v2319
      %2353 = vst.msk [vmem:[%s302 + $0x68] sm:$0xf] %vm2326, %v2320
      %2354 = vst.msk [vmem:[%s302 + $0x6c] sm:$0xf] %vm2326, %v2321
      %2355 = vst.msk [vmem:[%s302 + $0x70] sm:$0xf] %vm2326, %v2322
      %2356 = vst.msk [vmem:[%s302 + $0x74] sm:$0xf] %vm2326, %v2323
      %2357 = vst.msk [vmem:[%s302 + $0x78] sm:$0xf] %vm2326, %v2324
      %2358 = vst.msk [vmem:[%s302 + $0x7c] sm:$0xf] %vm2326, %v2325
      %s2359 = smul.u32 32, %s18
      %p2360 = scmp.lt.s32.totalorder %s2359, 63
      %s2361 = scalar_select %p2360, %s2359, 63
      %s2362 = smul.addr %s2361, 4
      %s2363 = scalar_lea.vmem %s7, %s2362
      // Predicated region
      $region49: #{distribute_forward_nhwc.1} parent=47 // pred_check
        %p2364 = pneg %p193
      $region50: #{distribute_forward_nhwc.1} parent=47 // pred_check_branch
        %2366 = sbr.rel (%p2364) target = $region52
      $region51: #{distribute_forward_nhwc.1} parent=47 // pred_region
        %s2367 = smul.u32 32, %s18
      $region52: #{distribute_forward_nhwc.1} parent=47 // pred_fallthru
        _
    $region48: #{distribute_forward_nhwc.1} parent=5 // pred_fallthru
      _
    %p2368 = scmp.le.s32.totalorder 2, %s13
    // Predicated region
    $region53: #{distribute_forward_nhwc.1} parent=5 // pred_check
      %p2369 = pneg %p2368
    $region54: #{distribute_forward_nhwc.1} parent=5 // pred_check_branch
      %2371 = sbr.rel (%p2369) target = $region56
    $region55: #{distribute_forward_nhwc.1} parent=5 // pred_region
      %s2372 = ssub.s32 %s13, 2
      // Predicated region
      $region57: #{distribute_forward_nhwc.1} parent=55 // pred_check
        %p2373 = pneg %p199
      $region58: #{distribute_forward_nhwc.1} parent=55 // pred_check_branch
        %2375 = sbr.rel (%p2373) target = $region60
      $region59: #{distribute_forward_nhwc.1} parent=55 // pred_region
        %s2376 = smul.u32 32, %s19
        %p2377 = scmp.lt.s32.totalorder %s2376, 63
        %s2378 = scalar_select %p2377, %s2376, 63
        %s2379 = smul.addr %s2378, 4
        %s2380 = scalar_lea.vmem %s7, %s2379
      $region60: #{distribute_forward_nhwc.1} parent=55 // pred_fallthru
        _
    $region56: #{distribute_forward_nhwc.1} parent=5 // pred_fallthru
      _
  $region6: #{distribute_forward_nhwc.1} parent=0 // loop_footer
    %s17 = sadd.s32 1, %s13
  $region7: #{distribute_forward_nhwc.1} parent=0 // loop_footer_branch
    %12 = sbr.rel target = $region3
  $region8: #{distribute_forward_nhwc.1} parent=0 // loop_exit
    _

</llo_original>
